<compile_context>
chip_gen: v7x
topology: tpu7x:2x2x1
jax: 0.10.0
libtpu: 0.0.40
codegen_flags: <defaults>
</compile_context>

<pallas_src>
import functools

import jax
import jax.numpy as jnp
from jax.experimental import pallas as pl
from jax.experimental.pallas import tpu as pltpu


# ----------------------------- configuration -------------------------------
PARAM_SET = dict(
    obs_shape=16,
    n_actions=8,
    obs_hidden_dim=32,
    action_hidden_dim=32,
    hidden_dim=64,
    hidden_layer=2,
    ob_style="primitive",
    cuda=False,
)
BATCH = 256          # total rows per invocation
LANE = 128           # lane-dense padding for every layer


def _num_tensorcores():
    """One grid step per TensorCore: 1 on v5e/v6e, 2 on megacore-style chips."""
    try:
        kind = jax.devices()[0].device_kind.lower()
    except Exception:
        return 1
    return 2 if any(t in kind for t in ("v7", "v5p", "v4")) else 1


# ------------------------------- kernel ------------------------------------
def dnn_agent_kernel(n_mats, x_ref, w_ref, b_ref, out_ref):
    """x_ref: (BT, 128) bf16, w_ref: (n_mats, 128, 128) bf16,
    b_ref: (n_mats, 1, 128) f32, out_ref: (BT, 128) bf16.

    Layer 0 is the fused block-diagonal obs/action encoder, layer 1 is the
    concat encoder, layers 2..n_mats-2 are the fc stack, layer n_mats-1 is
    the tanh decoder.  All padded rows/cols are zero so padding is inert.
    """
    x = x_ref[...]  # already bf16

    # relu layers (static unroll; n_mats is known at trace time -> LLO can
    # overlap next-layer MXU weight push with the previous dot's drain)
    for i in range(n_mats - 1):
        y = jnp.dot(x, w_ref[i], preferred_element_type=jnp.float32) + b_ref[i]
        x = jnp.maximum(y, 0.0).astype(jnp.bfloat16)

    # decoder + tanh (lane-dense (BT,128) unmasked store; wrapper slices)
    out_ref[...] = jnp.tanh(
        jnp.dot(x, w_ref[n_mats - 1], preferred_element_type=jnp.float32)
        + b_ref[n_mats - 1]).astype(out_ref.dtype)


# ------------------------------ wrapper -------------------------------------
@functools.partial(jax.jit, static_argnames=("n_actions", "num_tiles"))
def dnn_agent_forward(w_slab, b_slab, obs, action_prob, *, n_actions,
                      num_tiles=1):
    B = obs.shape[0]
    d_in = obs.shape[1] + action_prob.shape[1]
    n_mats = w_slab.shape[0]

    # One block per TensorCore; each tile a multiple of 8 sublanes.
    batch_tile = pl.cdiv(B, 8 * num_tiles) * 8
    b_pad = batch_tile * num_tiles

    # Fused concat + pad into one lane-dense bf16 (b_pad, 128) slab.
    # Padded lanes/rows are exactly zero -> inert through every relu layer.
    x_in = jnp.concatenate([obs, action_prob], axis=-1).astype(jnp.bfloat16)
    x_in = jnp.pad(x_in, ((0, b_pad - B), (0, LANE - d_in)))

    out = pl.pallas_call(
        functools.partial(dnn_agent_kernel, n_mats),
        out_shape=jax.ShapeDtypeStruct((b_pad, LANE), jnp.bfloat16),
        grid=(num_tiles,),
        in_specs=[
            # activations: one tile per TensorCore
            pl.BlockSpec((batch_tile, LANE), lambda i: (i, 0)),
            # weights / biases: constant block -> VMEM-resident across steps
            pl.BlockSpec((n_mats, LANE, LANE), lambda i: (0, 0, 0)),
            pl.BlockSpec((n_mats, 1, LANE), lambda i: (0, 0, 0)),
        ],
        out_specs=pl.BlockSpec((batch_tile, LANE), lambda i: (i, 0)),
        compiler_params=pltpu.CompilerParams(
            dimension_semantics=("parallel",)),
    )(x_in, w_slab, b_slab)

    # Slice off batch/lane padding; cast back to f32 for the caller.
    # (Padded rows hold tanh(b_dec) and must not be reused downstream.)
    return out[:B, :n_actions].astype(jnp.float32)


# -------------------------- parameter construction --------------------------
def init_params(key, ps):
    """Deterministic synthetic weights.  nn.Linear(in,out) weight is (out,in);
    we store the transpose (in,out) and 1-D biases (out,)."""
    OH, AH, H = ps["obs_hidden_dim"], ps["action_hidden_dim"], ps["hidden_dim"]
    IN, OUT, L = ps["obs_shape"], ps["n_actions"], ps["hidden_layer"]

    def lin(k, fan_in, fan_out):
        kw, kb = jax.random.split(k)
        bound = 1.0 / jnp.sqrt(fan_in)
        w = jax.random.uniform(kw, (fan_in, fan_out), jnp.float32, -bound, bound)
        b = jax.random.uniform(kb, (fan_out,), jnp.float32, -bound, bound)
        return w, b

    keys = jax.random.split(key, 4 + L)
    w_obs, b_obs = lin(keys[0], IN, OH)
    w_act, b_act = lin(keys[1], OUT, AH)
    w_cat, b_cat = lin(keys[2], OH + AH, H)
    w_dec, b_dec = lin(keys[3], H, OUT)
    fc_w, fc_b = [], []
    for i in range(L):
        w, b = lin(keys[4 + i], H, H)
        fc_w.append(w)
        fc_b.append(b)

    return dict(
        w_obs=w_obs, b_obs=b_obs,
        w_act=w_act, b_act=b_act,
        w_cat=w_cat, b_cat=b_cat,
        w_fc=jnp.stack(fc_w, axis=0),      # (L, H, H)
        b_fc=jnp.stack(fc_b, axis=0),      # (L, H)
        w_dec=w_dec, b_dec=b_dec,
    )


def pack_params(p, ps):
    """Pack all layers into one bf16 weight slab (n_mats, 128, 128) and one
    f32 bias slab (n_mats, 1, 128).  Layer 0 is the block-diagonal fusion of
    the obs and action encoders; all padding is zero, so padded lanes stay
    exactly zero through every relu layer."""
    OH, AH, H = ps["obs_hidden_dim"], ps["action_hidden_dim"], ps["hidden_dim"]
    IN, OUT, L = ps["obs_shape"], ps["n_actions"], ps["hidden_layer"]
    assert IN + OUT <= LANE and OH + AH <= LANE and H <= LANE and OUT <= LANE
    n_mats = L + 3

    W = jnp.zeros((n_mats, LANE, LANE), jnp.float32)
    Bv = jnp.zeros((n_mats, 1, LANE), jnp.float32)

    # layer 0: fused (block-diagonal) obs / action encoders
    W = W.at[0, 0:IN, 0:OH].set(p["w_obs"])
    W = W.at[0, IN:IN + OUT, OH:OH + AH].set(p["w_act"])
    Bv = Bv.at[0, 0, 0:OH].set(p["b_obs"])
    Bv = Bv.at[0, 0, OH:OH + AH].set(p["b_act"])
    # layer 1: concat encoder
    W = W.at[1, 0:OH + AH, 0:H].set(p["w_cat"])
    Bv = Bv.at[1, 0, 0:H].set(p["b_cat"])
    # hidden fc stack
    for i in range(L):
        W = W.at[2 + i, 0:H, 0:H].set(p["w_fc"][i])
        Bv = Bv.at[2 + i, 0, 0:H].set(p["b_fc"][i])
    # decoder
    W = W.at[2 + L, 0:H, 0:OUT].set(p["w_dec"])
    Bv = Bv.at[2 + L, 0, 0:OUT].set(p["b_dec"])

    return W.astype(jnp.bfloat16), Bv


def reference_forward(p, ps, obs, action_prob):
    relu = lambda v: jnp.maximum(v, 0.0)
    h_obs = relu(obs @ p["w_obs"] + p["b_obs"])
    h_act = relu(action_prob @ p["w_act"] + p["b_act"])
    x = relu(jnp.concatenate([h_obs, h_act], axis=-1) @ p["w_cat"] + p["b_cat"])
    for i in range(ps["hidden_layer"]):
        x = relu(x @ p["w_fc"][i] + p["b_fc"][i])
    return jnp.tanh(x @ p["w_dec"] + p["b_dec"])


# --------------------------------- main --------------------------------------
if __name__ == "__main__":
    key = jax.random.PRNGKey(0)
    k_par, k_obs, k_act = jax.random.split(key, 3)

    params = init_params(k_par, PARAM_SET)
    w_slab, b_slab = pack_params(params, PARAM_SET)

    obs = jax.random.normal(k_obs, (BATCH, PARAM_SET["obs_shape"]), jnp.float32)
    action_prob = jax.nn.softmax(
        jax.random.normal(k_act, (BATCH, PARAM_SET["n_actions"]), jnp.float32),
        axis=-1)

    out = dnn_agent_forward(w_slab, b_slab, obs, action_prob,
                            n_actions=PARAM_SET["n_actions"],
                            num_tiles=_num_tensorcores())
    out = jax.block_until_ready(out)

    ref = reference_forward(params, PARAM_SET, obs, action_prob)
    assert out.shape == (BATCH, PARAM_SET["n_actions"])
    # bf16 activations + bf16 MXU weights -> loosened tolerance vs. the pure
    # f32 reference (inherent to the bf16 design, documented per review).
    max_err = float(jnp.max(jnp.abs(out - ref)))
    assert jnp.allclose(out, ref, atol=3e-2, rtol=3e-2), max_err

    print("KERNEL_OK")
</pallas_src>

<mosaic_0001>
module attributes {stable_mosaic.version = 11 : i64} {
  func.func @dnn_agent_kernel(%arg0: i32, %arg1: memref<256x128xbf16, #tpu.memory_space<vmem>>, %arg2: memref<5x128x128xbf16, #tpu.memory_space<vmem>>, %arg3: memref<5x1x128xf32, #tpu.memory_space<vmem>>, %arg4: memref<256x128xbf16, #tpu.memory_space<vmem>>) attributes {dimension_semantics = [#tpu.dimension_semantics<parallel>], iteration_bounds = array<i64: 1>, scalar_prefetch = 0 : i64, scratch_operands = 0 : i64, tpu.core_type = #tpu.core_type<tc>, window_params = [{transform_indices = @transform_0, window_bounds = array<i64: 256, 128>}, {pipeline_mode = #tpu.pipeline_mode<synchronous>, transform_indices = @transform_1, window_bounds = array<i64: 5, 128, 128>}, {pipeline_mode = #tpu.pipeline_mode<synchronous>, transform_indices = @transform_2, window_bounds = array<i64: 5, 1, 128>}, {transform_indices = @transform_3, window_bounds = array<i64: 256, 128>}]} {
    %c0 = arith.constant 0 : index
    %c0_0 = arith.constant 0 : index
    %0 = vector.load %arg1[%c0, %c0_0] : memref<256x128xbf16, #tpu.memory_space<vmem>>, vector<256x128xbf16>
    %c0_1 = arith.constant 0 : index
    %c0_2 = arith.constant 0 : index
    %c0_3 = arith.constant 0 : index
    %1 = vector.load %arg2[%c0_1, %c0_2, %c0_3] : memref<5x128x128xbf16, #tpu.memory_space<vmem>>, vector<1x128x128xbf16>
    %2 = vector.shape_cast %1 : vector<1x128x128xbf16> to vector<128x128xbf16>
    %cst = arith.constant dense<0.000000e+00> : vector<256x128xf32>
    %3 = tpu.matmul %0, %2, %cst {dimension_numbers = #tpu.dot_dimension_numbers<[1], [0], [0], [1], [0, 0, 1, 1], [], []>} : vector<256x128xbf16>, vector<128x128xbf16>, vector<256x128xf32> -> vector<256x128xf32>
    %c0_4 = arith.constant 0 : index
    %c0_5 = arith.constant 0 : index
    %c0_6 = arith.constant 0 : index
    %4 = vector.load %arg3[%c0_4, %c0_5, %c0_6] : memref<5x1x128xf32, #tpu.memory_space<vmem>>, vector<1x1x128xf32>
    %5 = vector.shape_cast %4 : vector<1x1x128xf32> to vector<1x128xf32>
    %6 = vector.broadcast %5 : vector<1x128xf32> to vector<256x128xf32>
    %7 = arith.addf %3, %6 : vector<256x128xf32>
    %cst_7 = arith.constant 0.000000e+00 : f32
    %8 = vector.broadcast %cst_7 : f32 to vector<256x128xf32>
    %9 = arith.maximumf %7, %8 : vector<256x128xf32>
    %10 = arith.truncf %9 : vector<256x128xf32> to vector<256x128xbf16>
    %c1 = arith.constant 1 : index
    %c0_8 = arith.constant 0 : index
    %c0_9 = arith.constant 0 : index
    %11 = vector.load %arg2[%c1, %c0_8, %c0_9] : memref<5x128x128xbf16, #tpu.memory_space<vmem>>, vector<1x128x128xbf16>
    %12 = vector.shape_cast %11 : vector<1x128x128xbf16> to vector<128x128xbf16>
    %cst_10 = arith.constant dense<0.000000e+00> : vector<256x128xf32>
    %13 = tpu.matmul %10, %12, %cst_10 {dimension_numbers = #tpu.dot_dimension_numbers<[1], [0], [0], [1], [0, 0, 1, 1], [], []>} : vector<256x128xbf16>, vector<128x128xbf16>, vector<256x128xf32> -> vector<256x128xf32>
    %c1_11 = arith.constant 1 : index
    %c0_12 = arith.constant 0 : index
    %c0_13 = arith.constant 0 : index
    %14 = vector.load %arg3[%c1_11, %c0_12, %c0_13] : memref<5x1x128xf32, #tpu.memory_space<vmem>>, vector<1x1x128xf32>
    %15 = vector.shape_cast %14 : vector<1x1x128xf32> to vector<1x128xf32>
    %16 = vector.broadcast %15 : vector<1x128xf32> to vector<256x128xf32>
    %17 = arith.addf %13, %16 : vector<256x128xf32>
    %cst_14 = arith.constant 0.000000e+00 : f32
    %18 = vector.broadcast %cst_14 : f32 to vector<256x128xf32>
    %19 = arith.maximumf %17, %18 : vector<256x128xf32>
    %20 = arith.truncf %19 : vector<256x128xf32> to vector<256x128xbf16>
    %c2 = arith.constant 2 : index
    %c0_15 = arith.constant 0 : index
    %c0_16 = arith.constant 0 : index
    %21 = vector.load %arg2[%c2, %c0_15, %c0_16] : memref<5x128x128xbf16, #tpu.memory_space<vmem>>, vector<1x128x128xbf16>
    %22 = vector.shape_cast %21 : vector<1x128x128xbf16> to vector<128x128xbf16>
    %cst_17 = arith.constant dense<0.000000e+00> : vector<256x128xf32>
    %23 = tpu.matmul %20, %22, %cst_17 {dimension_numbers = #tpu.dot_dimension_numbers<[1], [0], [0], [1], [0, 0, 1, 1], [], []>} : vector<256x128xbf16>, vector<128x128xbf16>, vector<256x128xf32> -> vector<256x128xf32>
    %c2_18 = arith.constant 2 : index
    %c0_19 = arith.constant 0 : index
    %c0_20 = arith.constant 0 : index
    %24 = vector.load %arg3[%c2_18, %c0_19, %c0_20] : memref<5x1x128xf32, #tpu.memory_space<vmem>>, vector<1x1x128xf32>
    %25 = vector.shape_cast %24 : vector<1x1x128xf32> to vector<1x128xf32>
    %26 = vector.broadcast %25 : vector<1x128xf32> to vector<256x128xf32>
    %27 = arith.addf %23, %26 : vector<256x128xf32>
    %cst_21 = arith.constant 0.000000e+00 : f32
    %28 = vector.broadcast %cst_21 : f32 to vector<256x128xf32>
    %29 = arith.maximumf %27, %28 : vector<256x128xf32>
    %30 = arith.truncf %29 : vector<256x128xf32> to vector<256x128xbf16>
    %c3 = arith.constant 3 : index
    %c0_22 = arith.constant 0 : index
    %c0_23 = arith.constant 0 : index
    %31 = vector.load %arg2[%c3, %c0_22, %c0_23] : memref<5x128x128xbf16, #tpu.memory_space<vmem>>, vector<1x128x128xbf16>
    %32 = vector.shape_cast %31 : vector<1x128x128xbf16> to vector<128x128xbf16>
    %cst_24 = arith.constant dense<0.000000e+00> : vector<256x128xf32>
    %33 = tpu.matmul %30, %32, %cst_24 {dimension_numbers = #tpu.dot_dimension_numbers<[1], [0], [0], [1], [0, 0, 1, 1], [], []>} : vector<256x128xbf16>, vector<128x128xbf16>, vector<256x128xf32> -> vector<256x128xf32>
    %c3_25 = arith.constant 3 : index
    %c0_26 = arith.constant 0 : index
    %c0_27 = arith.constant 0 : index
    %34 = vector.load %arg3[%c3_25, %c0_26, %c0_27] : memref<5x1x128xf32, #tpu.memory_space<vmem>>, vector<1x1x128xf32>
    %35 = vector.shape_cast %34 : vector<1x1x128xf32> to vector<1x128xf32>
    %36 = vector.broadcast %35 : vector<1x128xf32> to vector<256x128xf32>
    %37 = arith.addf %33, %36 : vector<256x128xf32>
    %cst_28 = arith.constant 0.000000e+00 : f32
    %38 = vector.broadcast %cst_28 : f32 to vector<256x128xf32>
    %39 = arith.maximumf %37, %38 : vector<256x128xf32>
    %40 = arith.truncf %39 : vector<256x128xf32> to vector<256x128xbf16>
    %c4 = arith.constant 4 : index
    %c0_29 = arith.constant 0 : index
    %c0_30 = arith.constant 0 : index
    %41 = vector.load %arg2[%c4, %c0_29, %c0_30] : memref<5x128x128xbf16, #tpu.memory_space<vmem>>, vector<1x128x128xbf16>
    %42 = vector.shape_cast %41 : vector<1x128x128xbf16> to vector<128x128xbf16>
    %cst_31 = arith.constant dense<0.000000e+00> : vector<256x128xf32>
    %43 = tpu.matmul %40, %42, %cst_31 {dimension_numbers = #tpu.dot_dimension_numbers<[1], [0], [0], [1], [0, 0, 1, 1], [], []>} : vector<256x128xbf16>, vector<128x128xbf16>, vector<256x128xf32> -> vector<256x128xf32>
    %c4_32 = arith.constant 4 : index
    %c0_33 = arith.constant 0 : index
    %c0_34 = arith.constant 0 : index
    %44 = vector.load %arg3[%c4_32, %c0_33, %c0_34] : memref<5x1x128xf32, #tpu.memory_space<vmem>>, vector<1x1x128xf32>
    %45 = vector.shape_cast %44 : vector<1x1x128xf32> to vector<1x128xf32>
    %46 = vector.broadcast %45 : vector<1x128xf32> to vector<256x128xf32>
    %47 = arith.addf %43, %46 : vector<256x128xf32>
    %48 = math.tanh %47 : vector<256x128xf32>
    %49 = arith.truncf %48 : vector<256x128xf32> to vector<256x128xbf16>
    %c0_35 = arith.constant 0 : index
    %c0_36 = arith.constant 0 : index
    %50 = vector.load %arg4[%c0_35, %c0_36] : memref<256x128xbf16, #tpu.memory_space<vmem>>, vector<256x128xbf16>
    tpu.vector_store %arg4[%c0_35, %c0_36], %49 {strides = array<i32>} : memref<256x128xbf16, #tpu.memory_space<vmem>>, vector<256x128xbf16>,
    return
  }
  func.func @transform_0(%arg0: i32) -> (i32, i32) {
    %c0_i32 = arith.constant 0 : i32
    %c0_i32_0 = arith.constant 0 : i32
    return %arg0, %c0_i32 : i32, i32
  }
  func.func @transform_1(%arg0: i32) -> (i32, i32, i32) {
    %c0_i32 = arith.constant 0 : i32
    %c0_i32_0 = arith.constant 0 : i32
    %c0_i32_1 = arith.constant 0 : i32
    %c0_i32_2 = arith.constant 0 : i32
    return %c0_i32, %c0_i32_0, %c0_i32_1 : i32, i32, i32
  }
  func.func @transform_2(%arg0: i32) -> (i32, i32, i32) {
    %c0_i32 = arith.constant 0 : i32
    %c0_i32_0 = arith.constant 0 : i32
    %c0_i32_1 = arith.constant 0 : i32
    %c0_i32_2 = arith.constant 0 : i32
    return %c0_i32, %c0_i32_0, %c0_i32_1 : i32, i32, i32
  }
  func.func @transform_3(%arg0: i32) -> (i32, i32) {
    %c0_i32 = arith.constant 0 : i32
    %c0_i32_0 = arith.constant 0 : i32
    return %arg0, %c0_i32 : i32, i32
  }
}

</mosaic_0001>

<llo_original>
// kernel: dnn_agent_forward.1
$region0: #{dnn_agent_forward.1}
  #allocation0 [shape = 'u32[]', space=smem, size = 0x4, offset = 0x4, fixed_abs, tag = 'smem constant byte address 0x4 - core index']
  #allocation1 [shape = 'u32[144,128]{1,0:T(1,128)}', space=vmem, size = 0x12000, scoped, tag = 'internal scratch']
  %s0 = inlined_call_operand.vmem [shape: bf16[256,128], index: 0, kind: input, shape index: {}]
  %s1 = inlined_call_operand.vmem [shape: bf16[5,128,128], index: 1, kind: input, shape index: {}]
  %s2 = inlined_call_operand.vmem [shape: f32[5,1,128], index: 2, kind: input, shape index: {}]
  %s3 = inlined_call_operand.vmem [shape: bf16[256,128], index: 3, kind: output, shape index: {}]
  %s4 = sld [smem:[#allocation0]]
  $region22: #{dnn_agent_forward.1} parent=0
    _
  %s6 = ssub.s32 1, %s4
  %s7 = scalar_select 0, %s6, %s4
  // Predicated region
  $region2: #{dnn_agent_forward.1} parent=0 // pred_check
    _
  $region3: #{dnn_agent_forward.1} parent=0 // pred_check_branch
    %9 = sbr.rel (0) target = $region5
  $region4: #{dnn_agent_forward.1} parent=0 // pred_region
    _
  $region5: #{dnn_agent_forward.1} parent=0 // pred_fallthru
    _
  // Predicated region
  $region6: #{dnn_agent_forward.1} parent=0 // pred_check
    _
  $region7: #{dnn_agent_forward.1} parent=0 // pred_check_branch
    %11 = sbr.rel (0) target = $region9
  $region8: #{dnn_agent_forward.1} parent=0 // pred_region
    _
  $region9: #{dnn_agent_forward.1} parent=0 // pred_fallthru
    _
  // Predicated region
  $region10: #{dnn_agent_forward.1} parent=0 // pred_check
    _
  $region11: #{dnn_agent_forward.1} parent=0 // pred_check_branch
    %13 = sbr.rel (0) target = $region13
  $region12: #{dnn_agent_forward.1} parent=0 // pred_region
    _
  $region13: #{dnn_agent_forward.1} parent=0 // pred_fallthru
    _
  %v15 = vld [vmem:[%s0] sm:$0xf]
  %v16 = vld [vmem:[%s0 + $0x4] sm:$0xf]
  %v17 = vld [vmem:[%s0 + $0x8] sm:$0xf]
  %v18 = vld [vmem:[%s0 + $0xc] sm:$0xf]
  %v19 = vld [vmem:[%s0 + $0x10] sm:$0xf]
  %v20 = vld [vmem:[%s0 + $0x14] sm:$0xf]
  %v21 = vld [vmem:[%s0 + $0x18] sm:$0xf]
  %v22 = vld [vmem:[%s0 + $0x1c] sm:$0xf]
  %v23 = vld [vmem:[%s0 + $0x20] sm:$0xf]
  %v24 = vld [vmem:[%s0 + $0x24] sm:$0xf]
  %v25 = vld [vmem:[%s0 + $0x28] sm:$0xf]
  %v26 = vld [vmem:[%s0 + $0x2c] sm:$0xf]
  %v27 = vld [vmem:[%s0 + $0x30] sm:$0xf]
  %v28 = vld [vmem:[%s0 + $0x34] sm:$0xf]
  %v29 = vld [vmem:[%s0 + $0x38] sm:$0xf]
  %v30 = vld [vmem:[%s0 + $0x3c] sm:$0xf]
  %v31 = vld [vmem:[%s0 + $0x40] sm:$0xf]
  %v32 = vld [vmem:[%s0 + $0x44] sm:$0xf]
  %v33 = vld [vmem:[%s0 + $0x48] sm:$0xf]
  %v34 = vld [vmem:[%s0 + $0x4c] sm:$0xf]
  %v35 = vld [vmem:[%s0 + $0x50] sm:$0xf]
  %v36 = vld [vmem:[%s0 + $0x54] sm:$0xf]
  %v37 = vld [vmem:[%s0 + $0x58] sm:$0xf]
  %v38 = vld [vmem:[%s0 + $0x5c] sm:$0xf]
  %v39 = vld [vmem:[%s0 + $0x60] sm:$0xf]
  %v40 = vld [vmem:[%s0 + $0x64] sm:$0xf]
  %v41 = vld [vmem:[%s0 + $0x68] sm:$0xf]
  %v42 = vld [vmem:[%s0 + $0x6c] sm:$0xf]
  %v43 = vld [vmem:[%s0 + $0x70] sm:$0xf]
  %v44 = vld [vmem:[%s0 + $0x74] sm:$0xf]
  %v45 = vld [vmem:[%s0 + $0x78] sm:$0xf]
  %v46 = vld [vmem:[%s0 + $0x7c] sm:$0xf]
  %v47 = vld [vmem:[%s1] sm:$0xf]
  %v48 = vld [vmem:[%s1 + $0x4] sm:$0xf]
  %v49 = vld [vmem:[%s1 + $0x8] sm:$0xf]
  %v50 = vld [vmem:[%s1 + $0xc] sm:$0xf]
  %v51 = vld [vmem:[%s1 + $0x10] sm:$0xf]
  %v52 = vld [vmem:[%s1 + $0x14] sm:$0xf]
  %v53 = vld [vmem:[%s1 + $0x18] sm:$0xf]
  %v54 = vld [vmem:[%s1 + $0x1c] sm:$0xf]
  %v55 = vld [vmem:[%s1 + $0x20] sm:$0xf]
  %v56 = vld [vmem:[%s1 + $0x24] sm:$0xf]
  %v57 = vld [vmem:[%s1 + $0x28] sm:$0xf]
  %v58 = vld [vmem:[%s1 + $0x2c] sm:$0xf]
  %v59 = vld [vmem:[%s1 + $0x30] sm:$0xf]
  %v60 = vld [vmem:[%s1 + $0x34] sm:$0xf]
  %v61 = vld [vmem:[%s1 + $0x38] sm:$0xf]
  %v62 = vld [vmem:[%s1 + $0x3c] sm:$0xf]
  %v63 = vld [vmem:[%s2] sm:$0x1]
  %v65 = vlaneseq
  %v66 = vshrl.u32 %v65, 7
  %v67 = vsub.s32 0, %v66
  %v68 = vrot.slane %v63, %v67
  %v102 = vunpack.c.l.b16 %v15
  %v103 = vunpack.c.l.b16 %v16
  %v104 = vunpack.c.l.b16 %v17
  %v105 = vunpack.c.l.b16 %v18
  %v106 = vunpack.c.l.b16 %v19
  %v107 = vunpack.c.l.b16 %v20
  %v108 = vunpack.c.l.b16 %v21
  %v109 = vunpack.c.l.b16 %v22
  %v110 = vunpack.c.l.b16 %v23
  %v111 = vunpack.c.l.b16 %v24
  %v112 = vunpack.c.l.b16 %v25
  %v113 = vunpack.c.l.b16 %v26
  %v114 = vunpack.c.l.b16 %v27
  %v115 = vunpack.c.l.b16 %v28
  %v116 = vunpack.c.l.b16 %v29
  %v117 = vunpack.c.l.b16 %v30
  %v118 = vunpack.c.l.b16 %v31
  %v119 = vunpack.c.l.b16 %v32
  %v120 = vunpack.c.l.b16 %v33
  %v121 = vunpack.c.l.b16 %v34
  %v122 = vunpack.c.l.b16 %v35
  %v123 = vunpack.c.l.b16 %v36
  %v124 = vunpack.c.l.b16 %v37
  %v125 = vunpack.c.l.b16 %v38
  %v126 = vunpack.c.l.b16 %v39
  %v127 = vunpack.c.l.b16 %v40
  %v128 = vunpack.c.l.b16 %v41
  %v129 = vunpack.c.l.b16 %v42
  %v130 = vunpack.c.l.b16 %v43
  %v131 = vunpack.c.l.b16 %v44
  %v132 = vunpack.c.l.b16 %v45
  %v133 = vunpack.c.l.b16 %v46
  %v134 = vpack.c.b16 %v103, %v102
  %v135 = vpack.c.b16 %v105, %v104
  %v136 = vpack.c.b16 %v107, %v106
  %v137 = vpack.c.b16 %v109, %v108
  %v138 = vpack.c.b16 %v111, %v110
  %v139 = vpack.c.b16 %v113, %v112
  %v140 = vpack.c.b16 %v115, %v114
  %v141 = vpack.c.b16 %v117, %v116
  %v142 = vpack.c.b16 %v119, %v118
  %v143 = vpack.c.b16 %v121, %v120
  %v144 = vpack.c.b16 %v123, %v122
  %v145 = vpack.c.b16 %v125, %v124
  %v146 = vpack.c.b16 %v127, %v126
  %v147 = vpack.c.b16 %v129, %v128
  %v148 = vpack.c.b16 %v131, %v130
  %v149 = vpack.c.b16 %v133, %v132
  %v182 = vunpack.c.l.b16 %v47
  %v183 = vunpack.c.l.b16 %v48
  %v184 = vunpack.c.l.b16 %v49
  %v185 = vunpack.c.l.b16 %v50
  %v186 = vunpack.c.l.b16 %v51
  %v187 = vunpack.c.l.b16 %v52
  %v188 = vunpack.c.l.b16 %v53
  %v189 = vunpack.c.l.b16 %v54
  %v190 = vunpack.c.l.b16 %v55
  %v191 = vunpack.c.l.b16 %v56
  %v192 = vunpack.c.l.b16 %v57
  %v193 = vunpack.c.l.b16 %v58
  %v194 = vunpack.c.l.b16 %v59
  %v195 = vunpack.c.l.b16 %v60
  %v196 = vunpack.c.l.b16 %v61
  %v197 = vunpack.c.l.b16 %v62
  %v198 = vpack.c.b16 %v183, %v182
  %v199 = vpack.c.b16 %v185, %v184
  %v200 = vpack.c.b16 %v187, %v186
  %v201 = vpack.c.b16 %v189, %v188
  %v202 = vpack.c.b16 %v191, %v190
  %v203 = vpack.c.b16 %v193, %v192
  %v204 = vpack.c.b16 %v195, %v194
  %v205 = vpack.c.b16 %v197, %v196
  %214 = vmatprep.subr.bf16.mxu0 0
  %215 = vmatpush1.bf16.msra.mxu0 %v198
  %216 = vmatprep.subr.bf16.mxu0 0
  %217 = vmatpush1.bf16.msra.mxu0 %v199
  %218 = vmatprep.subr.bf16.mxu0 0
  %219 = vmatpush1.bf16.msra.mxu0 %v200
  %220 = vmatprep.subr.bf16.mxu0 0
  %221 = vmatpush1.bf16.msra.mxu0 %v201
  %222 = vmatprep.subr.bf16.mxu0 0
  %223 = vmatpush1.bf16.msra.mxu0 %v202
  %224 = vmatprep.subr.bf16.mxu0 0
  %225 = vmatpush1.bf16.msra.mxu0 %v203
  %226 = vmatprep.subr.bf16.mxu0 0
  %227 = vmatpush1.bf16.msra.mxu0 %v204
  %228 = vmatprep.subr.bf16.mxu0 0
  %229 = vmatpush1.bf16.msra.mxu0 %v205
  %230 = vmatprep.subr.bf16.mxu0 0
  %231 = vmatpush1.bf16.msra.mxu0 0
  %232 = vmatprep.subr.bf16.mxu0 0
  %233 = vmatpush1.bf16.msra.mxu0 0
  %234 = vmatprep.subr.bf16.mxu0 0
  %235 = vmatpush1.bf16.msra.mxu0 0
  %236 = vmatprep.subr.bf16.mxu0 0
  %237 = vmatpush1.bf16.msra.mxu0 0
  %238 = vmatprep.subr.bf16.mxu0 0
  %239 = vmatpush1.bf16.msra.mxu0 0
  %240 = vmatprep.subr.bf16.mxu0 0
  %241 = vmatpush1.bf16.msra.mxu0 0
  %242 = vmatprep.subr.bf16.mxu0 0
  %243 = vmatpush1.bf16.msra.mxu0 0
  %244 = vmatprep.subr.bf16.mxu0 0
  %245 = vmatpush1.bf16.msra.mxu0 0
  %246 = vmatprep.mubr.bf16.mxu0 0
  %247 = vmatmul.mubr.bf16.gmra.mrb[0].mxu0 %v134
  %v248 = vpop.f32.mrb[0].mxu0
  %v249 = vadd.f32 %v68, %v248
  %v250 = vpop.f32.mrb[0].mxu0
  %v251 = vpop.f32.mrb[0].mxu0
  %v252 = vadd.f32 %v68, %v251
  %v253 = vpop.f32.mrb[0].mxu0
  %254 = vmatprep.mubr.bf16.mxu0 0
  %255 = vmatmul.mubr.bf16.gmra.mrb[0].mxu0 %v135
  %v256 = vpop.f32.mrb[0].mxu0
  %v257 = vadd.f32 %v68, %v256
  %v258 = vpop.f32.mrb[0].mxu0
  %v259 = vpop.f32.mrb[0].mxu0
  %v260 = vadd.f32 %v68, %v259
  %v261 = vpop.f32.mrb[0].mxu0
  %262 = vmatprep.mubr.bf16.mxu0 0
  %263 = vmatmul.mubr.bf16.gmra.mrb[0].mxu0 %v136
  %v264 = vpop.f32.mrb[0].mxu0
  %v265 = vadd.f32 %v68, %v264
  %v266 = vpop.f32.mrb[0].mxu0
  %v267 = vpop.f32.mrb[0].mxu0
  %v268 = vadd.f32 %v68, %v267
  %v269 = vpop.f32.mrb[0].mxu0
  %270 = vmatprep.mubr.bf16.mxu0 0
  %271 = vmatmul.mubr.bf16.gmra.mrb[0].mxu0 %v137
  %v272 = vpop.f32.mrb[0].mxu0
  %v273 = vadd.f32 %v68, %v272
  %v274 = vpop.f32.mrb[0].mxu0
  %v275 = vpop.f32.mrb[0].mxu0
  %v276 = vadd.f32 %v68, %v275
  %v277 = vpop.f32.mrb[0].mxu0
  %278 = vmatprep.mubr.bf16.mxu0 0
  %279 = vmatmul.mubr.bf16.gmra.mrb[0].mxu0 %v138
  %v280 = vpop.f32.mrb[0].mxu0
  %v281 = vadd.f32 %v68, %v280
  %v282 = vpop.f32.mrb[0].mxu0
  %v283 = vpop.f32.mrb[0].mxu0
  %v284 = vadd.f32 %v68, %v283
  %v285 = vpop.f32.mrb[0].mxu0
  %286 = vmatprep.mubr.bf16.mxu0 0
  %287 = vmatmul.mubr.bf16.gmra.mrb[0].mxu0 %v139
  %v288 = vpop.f32.mrb[0].mxu0
  %v289 = vadd.f32 %v68, %v288
  %v290 = vpop.f32.mrb[0].mxu0
  %v291 = vpop.f32.mrb[0].mxu0
  %v292 = vadd.f32 %v68, %v291
  %v293 = vpop.f32.mrb[0].mxu0
  %294 = vmatprep.mubr.bf16.mxu0 0
  %295 = vmatmul.mubr.bf16.gmra.mrb[0].mxu0 %v140
  %v296 = vpop.f32.mrb[0].mxu0
  %v297 = vadd.f32 %v68, %v296
  %v298 = vpop.f32.mrb[0].mxu0
  %v299 = vpop.f32.mrb[0].mxu0
  %v300 = vadd.f32 %v68, %v299
  %v301 = vpop.f32.mrb[0].mxu0
  %302 = vmatprep.mubr.bf16.mxu0 0
  %303 = vmatmul.mubr.bf16.gmra.mrb[0].mxu0 %v141
  %v304 = vpop.f32.mrb[0].mxu0
  %v305 = vadd.f32 %v68, %v304
  %v306 = vpop.f32.mrb[0].mxu0
  %v307 = vpop.f32.mrb[0].mxu0
  %v308 = vadd.f32 %v68, %v307
  %v309 = vpop.f32.mrb[0].mxu0
  %310 = vmatprep.mubr.bf16.mxu0 0
  %311 = vmatmul.mubr.bf16.gmra.mrb[0].mxu0 %v142
  %v312 = vpop.f32.mrb[0].mxu0
  %v313 = vadd.f32 %v68, %v312
  %v314 = vpop.f32.mrb[0].mxu0
  %v315 = vpop.f32.mrb[0].mxu0
  %v316 = vadd.f32 %v68, %v315
  %v317 = vpop.f32.mrb[0].mxu0
  %318 = vmatprep.mubr.bf16.mxu0 0
  %319 = vmatmul.mubr.bf16.gmra.mrb[0].mxu0 %v143
  %v320 = vpop.f32.mrb[0].mxu0
  %v321 = vadd.f32 %v68, %v320
  %v322 = vpop.f32.mrb[0].mxu0
  %v323 = vpop.f32.mrb[0].mxu0
  %v324 = vadd.f32 %v68, %v323
  %v325 = vpop.f32.mrb[0].mxu0
  %326 = vmatprep.mubr.bf16.mxu0 0
  %327 = vmatmul.mubr.bf16.gmra.mrb[0].mxu0 %v144
  %v328 = vpop.f32.mrb[0].mxu0
  %v329 = vadd.f32 %v68, %v328
  %v330 = vpop.f32.mrb[0].mxu0
  %v331 = vpop.f32.mrb[0].mxu0
  %v332 = vadd.f32 %v68, %v331
  %v333 = vpop.f32.mrb[0].mxu0
  %334 = vmatprep.mubr.bf16.mxu0 0
  %335 = vmatmul.mubr.bf16.gmra.mrb[0].mxu0 %v145
  %v336 = vpop.f32.mrb[0].mxu0
  %v337 = vadd.f32 %v68, %v336
  %v338 = vpop.f32.mrb[0].mxu0
  %v339 = vpop.f32.mrb[0].mxu0
  %v340 = vadd.f32 %v68, %v339
  %v341 = vpop.f32.mrb[0].mxu0
  %342 = vmatprep.mubr.bf16.mxu0 0
  %343 = vmatmul.mubr.bf16.gmra.mrb[0].mxu0 %v146
  %v344 = vpop.f32.mrb[0].mxu0
  %v345 = vadd.f32 %v68, %v344
  %v346 = vpop.f32.mrb[0].mxu0
  %v347 = vpop.f32.mrb[0].mxu0
  %v348 = vadd.f32 %v68, %v347
  %v349 = vpop.f32.mrb[0].mxu0
  %350 = vmatprep.mubr.bf16.mxu0 0
  %351 = vmatmul.mubr.bf16.gmra.mrb[0].mxu0 %v147
  %v352 = vpop.f32.mrb[0].mxu0
  %v353 = vadd.f32 %v68, %v352
  %v354 = vpop.f32.mrb[0].mxu0
  %v355 = vpop.f32.mrb[0].mxu0
  %v356 = vadd.f32 %v68, %v355
  %v357 = vpop.f32.mrb[0].mxu0
  %358 = vmatprep.mubr.bf16.mxu0 0
  %359 = vmatmul.mubr.bf16.gmra.mrb[0].mxu0 %v148
  %v360 = vpop.f32.mrb[0].mxu0
  %v361 = vadd.f32 %v68, %v360
  %v362 = vpop.f32.mrb[0].mxu0
  %v363 = vpop.f32.mrb[0].mxu0
  %v364 = vadd.f32 %v68, %v363
  %v365 = vpop.f32.mrb[0].mxu0
  %366 = vmatprep.mubr.bf16.mxu0 0
  %367 = vmatmul.mubr.bf16.gmra.mrb[0].mxu0 %v149
  %v368 = vpop.f32.mrb[0].mxu0
  %v369 = vadd.f32 %v68, %v368
  %v370 = vpop.f32.mrb[0].mxu0
  %v371 = vpop.f32.mrb[0].mxu0
  %v372 = vadd.f32 %v68, %v371
  %v373 = vpop.f32.mrb[0].mxu0
  %374 = vdwg.mxu0
  %v375 = vmax.f32 %v249, 0.0
  %v376 = vmax.f32 %v252, 0.0
  %v377 = vmax.f32 %v257, 0.0
  %v378 = vmax.f32 %v260, 0.0
  %v379 = vmax.f32 %v265, 0.0
  %v380 = vmax.f32 %v268, 0.0
  %v381 = vmax.f32 %v273, 0.0
  %v382 = vmax.f32 %v276, 0.0
  %v383 = vmax.f32 %v281, 0.0
  %v384 = vmax.f32 %v284, 0.0
  %v385 = vmax.f32 %v289, 0.0
  %v386 = vmax.f32 %v292, 0.0
  %v387 = vmax.f32 %v297, 0.0
  %v388 = vmax.f32 %v300, 0.0
  %v389 = vmax.f32 %v305, 0.0
  %v390 = vmax.f32 %v308, 0.0
  %v391 = vmax.f32 %v313, 0.0
  %v392 = vmax.f32 %v316, 0.0
  %v393 = vmax.f32 %v321, 0.0
  %v394 = vmax.f32 %v324, 0.0
  %v395 = vmax.f32 %v329, 0.0
  %v396 = vmax.f32 %v332, 0.0
  %v397 = vmax.f32 %v337, 0.0
  %v398 = vmax.f32 %v340, 0.0
  %v399 = vmax.f32 %v345, 0.0
  %v400 = vmax.f32 %v348, 0.0
  %v401 = vmax.f32 %v353, 0.0
  %v402 = vmax.f32 %v356, 0.0
  %v403 = vmax.f32 %v361, 0.0
  %v404 = vmax.f32 %v364, 0.0
  %v405 = vmax.f32 %v369, 0.0
  %v406 = vmax.f32 %v372, 0.0
  %v407 = vpack.c.bf16 %v376, %v375
  %v408 = vpack.c.bf16 %v378, %v377
  %v409 = vpack.c.bf16 %v380, %v379
  %v410 = vpack.c.bf16 %v382, %v381
  %v411 = vpack.c.bf16 %v384, %v383
  %v412 = vpack.c.bf16 %v386, %v385
  %v413 = vpack.c.bf16 %v388, %v387
  %v414 = vpack.c.bf16 %v390, %v389
  %v415 = vpack.c.bf16 %v392, %v391
  %v416 = vpack.c.bf16 %v394, %v393
  %v417 = vpack.c.bf16 %v396, %v395
  %v418 = vpack.c.bf16 %v398, %v397
  %v419 = vpack.c.bf16 %v400, %v399
  %v420 = vpack.c.bf16 %v402, %v401
  %v421 = vpack.c.bf16 %v404, %v403
  %v422 = vpack.c.bf16 %v406, %v405
  %s423 = scalar_lea.vmem %s1, 64
  %v424 = vld [vmem:[%s423] sm:$0xf]
  %v425 = vld [vmem:[%s423 + $0x4] sm:$0xf]
  %v426 = vld [vmem:[%s423 + $0x8] sm:$0xf]
  %v427 = vld [vmem:[%s423 + $0xc] sm:$0xf]
  %v428 = vld [vmem:[%s423 + $0x10] sm:$0xf]
  %v429 = vld [vmem:[%s423 + $0x14] sm:$0xf]
  %v430 = vld [vmem:[%s423 + $0x18] sm:$0xf]
  %v431 = vld [vmem:[%s423 + $0x1c] sm:$0xf]
  %v432 = vld [vmem:[%s423 + $0x20] sm:$0xf]
  %v433 = vld [vmem:[%s423 + $0x24] sm:$0xf]
  %v434 = vld [vmem:[%s423 + $0x28] sm:$0xf]
  %v435 = vld [vmem:[%s423 + $0x2c] sm:$0xf]
  %v436 = vld [vmem:[%s423 + $0x30] sm:$0xf]
  %v437 = vld [vmem:[%s423 + $0x34] sm:$0xf]
  %v438 = vld [vmem:[%s423 + $0x38] sm:$0xf]
  %v439 = vld [vmem:[%s423 + $0x3c] sm:$0xf]
  %s440 = scalar_lea.vmem %s2, 1
  %v441 = vld [vmem:[%s440] sm:$0x1]
  %v443 = vlaneseq
  %v444 = vshrl.u32 %v443, 7
  %v445 = vsub.s32 0, %v444
  %v446 = vrot.slane %v441, %v445
  %v464 = vunpack.c.l.b16 %v424
  %v465 = vunpack.c.l.b16 %v425
  %v466 = vunpack.c.l.b16 %v426
  %v467 = vunpack.c.l.b16 %v427
  %v468 = vunpack.c.l.b16 %v428
  %v469 = vunpack.c.l.b16 %v429
  %v470 = vunpack.c.l.b16 %v430
  %v471 = vunpack.c.l.b16 %v431
  %v472 = vunpack.c.l.b16 %v432
  %v473 = vunpack.c.l.b16 %v433
  %v474 = vunpack.c.l.b16 %v434
  %v475 = vunpack.c.l.b16 %v435
  %v476 = vunpack.c.l.b16 %v436
  %v477 = vunpack.c.l.b16 %v437
  %v478 = vunpack.c.l.b16 %v438
  %v479 = vunpack.c.l.b16 %v439
  %v480 = vpack.c.b16 %v465, %v464
  %v481 = vpack.c.b16 %v467, %v466
  %v482 = vpack.c.b16 %v469, %v468
  %v483 = vpack.c.b16 %v471, %v470
  %v484 = vpack.c.b16 %v473, %v472
  %v485 = vpack.c.b16 %v475, %v474
  %v486 = vpack.c.b16 %v477, %v476
  %v487 = vpack.c.b16 %v479, %v478
  %496 = vmatprep.subr.bf16.mxu0 0
  %497 = vmatpush1.bf16.msra.mxu0 %v480
  %498 = vmatprep.subr.bf16.mxu0 0
  %499 = vmatpush1.bf16.msra.mxu0 %v481
  %500 = vmatprep.subr.bf16.mxu0 0
  %501 = vmatpush1.bf16.msra.mxu0 %v482
  %502 = vmatprep.subr.bf16.mxu0 0
  %503 = vmatpush1.bf16.msra.mxu0 %v483
  %504 = vmatprep.subr.bf16.mxu0 0
  %505 = vmatpush1.bf16.msra.mxu0 %v484
  %506 = vmatprep.subr.bf16.mxu0 0
  %507 = vmatpush1.bf16.msra.mxu0 %v485
  %508 = vmatprep.subr.bf16.mxu0 0
  %509 = vmatpush1.bf16.msra.mxu0 %v486
  %510 = vmatprep.subr.bf16.mxu0 0
  %511 = vmatpush1.bf16.msra.mxu0 %v487
  %512 = vmatprep.subr.bf16.mxu0 0
  %513 = vmatpush1.bf16.msra.mxu0 0
  %514 = vmatprep.subr.bf16.mxu0 0
  %515 = vmatpush1.bf16.msra.mxu0 0
  %516 = vmatprep.subr.bf16.mxu0 0
  %517 = vmatpush1.bf16.msra.mxu0 0
  %518 = vmatprep.subr.bf16.mxu0 0
  %519 = vmatpush1.bf16.msra.mxu0 0
  %520 = vmatprep.subr.bf16.mxu0 0
  %521 = vmatpush1.bf16.msra.mxu0 0
  %522 = vmatprep.subr.bf16.mxu0 0
  %523 = vmatpush1.bf16.msra.mxu0 0
  %524 = vmatprep.subr.bf16.mxu0 0
  %525 = vmatpush1.bf16.msra.mxu0 0
  %526 = vmatprep.subr.bf16.mxu0 0
  %527 = vmatpush1.bf16.msra.mxu0 0
  %528 = vmatprep.mubr.bf16.mxu0 0
  %529 = vmatmul.mubr.bf16.gmra.mrb[0].mxu0 %v407
  %v530 = vpop.f32.mrb[0].mxu0
  %v531 = vadd.f32 %v446, %v530
  %v532 = vpop.f32.mrb[0].mxu0
  %v533 = vpop.f32.mrb[0].mxu0
  %v534 = vadd.f32 %v446, %v533
  %v535 = vpop.f32.mrb[0].mxu0
  %536 = vmatprep.mubr.bf16.mxu0 0
  %537 = vmatmul.mubr.bf16.gmra.mrb[0].mxu0 %v408
  %v538 = vpop.f32.mrb[0].mxu0
  %v539 = vadd.f32 %v446, %v538
  %v540 = vpop.f32.mrb[0].mxu0
  %v541 = vpop.f32.mrb[0].mxu0
  %v542 = vadd.f32 %v446, %v541
  %v543 = vpop.f32.mrb[0].mxu0
  %544 = vmatprep.mubr.bf16.mxu0 0
  %545 = vmatmul.mubr.bf16.gmra.mrb[0].mxu0 %v409
  %v546 = vpop.f32.mrb[0].mxu0
  %v547 = vadd.f32 %v446, %v546
  %v548 = vpop.f32.mrb[0].mxu0
  %v549 = vpop.f32.mrb[0].mxu0
  %v550 = vadd.f32 %v446, %v549
  %v551 = vpop.f32.mrb[0].mxu0
  %552 = vmatprep.mubr.bf16.mxu0 0
  %553 = vmatmul.mubr.bf16.gmra.mrb[0].mxu0 %v410
  %v554 = vpop.f32.mrb[0].mxu0
  %v555 = vadd.f32 %v446, %v554
  %v556 = vpop.f32.mrb[0].mxu0
  %v557 = vpop.f32.mrb[0].mxu0
  %v558 = vadd.f32 %v446, %v557
  %v559 = vpop.f32.mrb[0].mxu0
  %560 = vmatprep.mubr.bf16.mxu0 0
  %561 = vmatmul.mubr.bf16.gmra.mrb[0].mxu0 %v411
  %v562 = vpop.f32.mrb[0].mxu0
  %v563 = vadd.f32 %v446, %v562
  %v564 = vpop.f32.mrb[0].mxu0
  %v565 = vpop.f32.mrb[0].mxu0
  %v566 = vadd.f32 %v446, %v565
  %v567 = vpop.f32.mrb[0].mxu0
  %568 = vmatprep.mubr.bf16.mxu0 0
  %569 = vmatmul.mubr.bf16.gmra.mrb[0].mxu0 %v412
  %v570 = vpop.f32.mrb[0].mxu0
  %v571 = vadd.f32 %v446, %v570
  %v572 = vpop.f32.mrb[0].mxu0
  %v573 = vpop.f32.mrb[0].mxu0
  %v574 = vadd.f32 %v446, %v573
  %v575 = vpop.f32.mrb[0].mxu0
  %576 = vmatprep.mubr.bf16.mxu0 0
  %577 = vmatmul.mubr.bf16.gmra.mrb[0].mxu0 %v413
  %v578 = vpop.f32.mrb[0].mxu0
  %v579 = vadd.f32 %v446, %v578
  %v580 = vpop.f32.mrb[0].mxu0
  %v581 = vpop.f32.mrb[0].mxu0
  %v582 = vadd.f32 %v446, %v581
  %v583 = vpop.f32.mrb[0].mxu0
  %584 = vmatprep.mubr.bf16.mxu0 0
  %585 = vmatmul.mubr.bf16.gmra.mrb[0].mxu0 %v414
  %v586 = vpop.f32.mrb[0].mxu0
  %v587 = vadd.f32 %v446, %v586
  %v588 = vpop.f32.mrb[0].mxu0
  %v589 = vpop.f32.mrb[0].mxu0
  %v590 = vadd.f32 %v446, %v589
  %v591 = vpop.f32.mrb[0].mxu0
  %592 = vmatprep.mubr.bf16.mxu0 0
  %593 = vmatmul.mubr.bf16.gmra.mrb[0].mxu0 %v415
  %v594 = vpop.f32.mrb[0].mxu0
  %v595 = vadd.f32 %v446, %v594
  %v596 = vpop.f32.mrb[0].mxu0
  %v597 = vpop.f32.mrb[0].mxu0
  %v598 = vadd.f32 %v446, %v597
  %v599 = vpop.f32.mrb[0].mxu0
  %600 = vmatprep.mubr.bf16.mxu0 0
  %601 = vmatmul.mubr.bf16.gmra.mrb[0].mxu0 %v416
  %v602 = vpop.f32.mrb[0].mxu0
  %v603 = vadd.f32 %v446, %v602
  %v604 = vpop.f32.mrb[0].mxu0
  %v605 = vpop.f32.mrb[0].mxu0
  %v606 = vadd.f32 %v446, %v605
  %v607 = vpop.f32.mrb[0].mxu0
  %608 = vmatprep.mubr.bf16.mxu0 0
  %609 = vmatmul.mubr.bf16.gmra.mrb[0].mxu0 %v417
  %v610 = vpop.f32.mrb[0].mxu0
  %v611 = vadd.f32 %v446, %v610
  %v612 = vpop.f32.mrb[0].mxu0
  %v613 = vpop.f32.mrb[0].mxu0
  %v614 = vadd.f32 %v446, %v613
  %v615 = vpop.f32.mrb[0].mxu0
  %616 = vmatprep.mubr.bf16.mxu0 0
  %617 = vmatmul.mubr.bf16.gmra.mrb[0].mxu0 %v418
  %v618 = vpop.f32.mrb[0].mxu0
  %v619 = vadd.f32 %v446, %v618
  %v620 = vpop.f32.mrb[0].mxu0
  %v621 = vpop.f32.mrb[0].mxu0
  %v622 = vadd.f32 %v446, %v621
  %v623 = vpop.f32.mrb[0].mxu0
  %624 = vmatprep.mubr.bf16.mxu0 0
  %625 = vmatmul.mubr.bf16.gmra.mrb[0].mxu0 %v419
  %v626 = vpop.f32.mrb[0].mxu0
  %v627 = vadd.f32 %v446, %v626
  %v628 = vpop.f32.mrb[0].mxu0
  %v629 = vpop.f32.mrb[0].mxu0
  %v630 = vadd.f32 %v446, %v629
  %v631 = vpop.f32.mrb[0].mxu0
  %632 = vmatprep.mubr.bf16.mxu0 0
  %633 = vmatmul.mubr.bf16.gmra.mrb[0].mxu0 %v420
  %v634 = vpop.f32.mrb[0].mxu0
  %v635 = vadd.f32 %v446, %v634
  %v636 = vpop.f32.mrb[0].mxu0
  %v637 = vpop.f32.mrb[0].mxu0
  %v638 = vadd.f32 %v446, %v637
  %v639 = vpop.f32.mrb[0].mxu0
  %640 = vmatprep.mubr.bf16.mxu0 0
  %641 = vmatmul.mubr.bf16.gmra.mrb[0].mxu0 %v421
  %v642 = vpop.f32.mrb[0].mxu0
  %v643 = vadd.f32 %v446, %v642
  %v644 = vpop.f32.mrb[0].mxu0
  %v645 = vpop.f32.mrb[0].mxu0
  %v646 = vadd.f32 %v446, %v645
  %v647 = vpop.f32.mrb[0].mxu0
  %648 = vmatprep.mubr.bf16.mxu0 0
  %649 = vmatmul.mubr.bf16.gmra.mrb[0].mxu0 %v422
  %v650 = vpop.f32.mrb[0].mxu0
  %v651 = vadd.f32 %v446, %v650
  %v652 = vpop.f32.mrb[0].mxu0
  %v653 = vpop.f32.mrb[0].mxu0
  %v654 = vadd.f32 %v446, %v653
  %v655 = vpop.f32.mrb[0].mxu0
  %656 = vdwg.mxu0
  %v657 = vmax.f32 %v531, 0.0
  %v658 = vmax.f32 %v534, 0.0
  %v659 = vmax.f32 %v539, 0.0
  %v660 = vmax.f32 %v542, 0.0
  %v661 = vmax.f32 %v547, 0.0
  %v662 = vmax.f32 %v550, 0.0
  %v663 = vmax.f32 %v555, 0.0
  %v664 = vmax.f32 %v558, 0.0
  %v665 = vmax.f32 %v563, 0.0
  %v666 = vmax.f32 %v566, 0.0
  %v667 = vmax.f32 %v571, 0.0
  %v668 = vmax.f32 %v574, 0.0
  %v669 = vmax.f32 %v579, 0.0
  %v670 = vmax.f32 %v582, 0.0
  %v671 = vmax.f32 %v587, 0.0
  %v672 = vmax.f32 %v590, 0.0
  %v673 = vmax.f32 %v595, 0.0
  %v674 = vmax.f32 %v598, 0.0
  %v675 = vmax.f32 %v603, 0.0
  %v676 = vmax.f32 %v606, 0.0
  %v677 = vmax.f32 %v611, 0.0
  %v678 = vmax.f32 %v614, 0.0
  %v679 = vmax.f32 %v619, 0.0
  %v680 = vmax.f32 %v622, 0.0
  %v681 = vmax.f32 %v627, 0.0
  %v682 = vmax.f32 %v630, 0.0
  %v683 = vmax.f32 %v635, 0.0
  %v684 = vmax.f32 %v638, 0.0
  %v685 = vmax.f32 %v643, 0.0
  %v686 = vmax.f32 %v646, 0.0
  %v687 = vmax.f32 %v651, 0.0
  %v688 = vmax.f32 %v654, 0.0
  %v689 = vpack.c.bf16 %v658, %v657
  %v690 = vpack.c.bf16 %v660, %v659
  %v691 = vpack.c.bf16 %v662, %v661
  %v692 = vpack.c.bf16 %v664, %v663
  %v693 = vpack.c.bf16 %v666, %v665
  %v694 = vpack.c.bf16 %v668, %v667
  %v695 = vpack.c.bf16 %v670, %v669
  %v696 = vpack.c.bf16 %v672, %v671
  %v697 = vpack.c.bf16 %v674, %v673
  %v698 = vpack.c.bf16 %v676, %v675
  %v699 = vpack.c.bf16 %v678, %v677
  %v700 = vpack.c.bf16 %v680, %v679
  %v701 = vpack.c.bf16 %v682, %v681
  %v702 = vpack.c.bf16 %v684, %v683
  %v703 = vpack.c.bf16 %v686, %v685
  %v704 = vpack.c.bf16 %v688, %v687
  %s705 = scalar_lea.vmem %s1, 128
  %v706 = vld [vmem:[%s705] sm:$0xf]
  %v707 = vld [vmem:[%s705 + $0x4] sm:$0xf]
  %v708 = vld [vmem:[%s705 + $0x8] sm:$0xf]
  %v709 = vld [vmem:[%s705 + $0xc] sm:$0xf]
  %v710 = vld [vmem:[%s705 + $0x10] sm:$0xf]
  %v711 = vld [vmem:[%s705 + $0x14] sm:$0xf]
  %v712 = vld [vmem:[%s705 + $0x18] sm:$0xf]
  %v713 = vld [vmem:[%s705 + $0x1c] sm:$0xf]
  %v714 = vld [vmem:[%s705 + $0x20] sm:$0xf]
  %v715 = vld [vmem:[%s705 + $0x24] sm:$0xf]
  %v716 = vld [vmem:[%s705 + $0x28] sm:$0xf]
  %v717 = vld [vmem:[%s705 + $0x2c] sm:$0xf]
  %v718 = vld [vmem:[%s705 + $0x30] sm:$0xf]
  %v719 = vld [vmem:[%s705 + $0x34] sm:$0xf]
  %v720 = vld [vmem:[%s705 + $0x38] sm:$0xf]
  %v721 = vld [vmem:[%s705 + $0x3c] sm:$0xf]
  %s722 = scalar_lea.vmem %s2, 2
  %v723 = vld [vmem:[%s722] sm:$0x1]
  %v725 = vlaneseq
  %v726 = vshrl.u32 %v725, 7
  %v727 = vsub.s32 0, %v726
  %v728 = vrot.slane %v723, %v727
  %v746 = vunpack.c.l.b16 %v706
  %v747 = vunpack.c.l.b16 %v707
  %v748 = vunpack.c.l.b16 %v708
  %v749 = vunpack.c.l.b16 %v709
  %v750 = vunpack.c.l.b16 %v710
  %v751 = vunpack.c.l.b16 %v711
  %v752 = vunpack.c.l.b16 %v712
  %v753 = vunpack.c.l.b16 %v713
  %v754 = vunpack.c.l.b16 %v714
  %v755 = vunpack.c.l.b16 %v715
  %v756 = vunpack.c.l.b16 %v716
  %v757 = vunpack.c.l.b16 %v717
  %v758 = vunpack.c.l.b16 %v718
  %v759 = vunpack.c.l.b16 %v719
  %v760 = vunpack.c.l.b16 %v720
  %v761 = vunpack.c.l.b16 %v721
  %v762 = vpack.c.b16 %v747, %v746
  %v763 = vpack.c.b16 %v749, %v748
  %v764 = vpack.c.b16 %v751, %v750
  %v765 = vpack.c.b16 %v753, %v752
  %v766 = vpack.c.b16 %v755, %v754
  %v767 = vpack.c.b16 %v757, %v756
  %v768 = vpack.c.b16 %v759, %v758
  %v769 = vpack.c.b16 %v761, %v760
  %778 = vmatprep.subr.bf16.mxu0 0
  %779 = vmatpush1.bf16.msra.mxu0 %v762
  %780 = vmatprep.subr.bf16.mxu0 0
  %781 = vmatpush1.bf16.msra.mxu0 %v763
  %782 = vmatprep.subr.bf16.mxu0 0
  %783 = vmatpush1.bf16.msra.mxu0 %v764
  %784 = vmatprep.subr.bf16.mxu0 0
  %785 = vmatpush1.bf16.msra.mxu0 %v765
  %786 = vmatprep.subr.bf16.mxu0 0
  %787 = vmatpush1.bf16.msra.mxu0 %v766
  %788 = vmatprep.subr.bf16.mxu0 0
  %789 = vmatpush1.bf16.msra.mxu0 %v767
  %790 = vmatprep.subr.bf16.mxu0 0
  %791 = vmatpush1.bf16.msra.mxu0 %v768
  %792 = vmatprep.subr.bf16.mxu0 0
  %793 = vmatpush1.bf16.msra.mxu0 %v769
  %794 = vmatprep.subr.bf16.mxu0 0
  %795 = vmatpush1.bf16.msra.mxu0 0
  %796 = vmatprep.subr.bf16.mxu0 0
  %797 = vmatpush1.bf16.msra.mxu0 0
  %798 = vmatprep.subr.bf16.mxu0 0
  %799 = vmatpush1.bf16.msra.mxu0 0
  %800 = vmatprep.subr.bf16.mxu0 0
  %801 = vmatpush1.bf16.msra.mxu0 0
  %802 = vmatprep.subr.bf16.mxu0 0
  %803 = vmatpush1.bf16.msra.mxu0 0
  %804 = vmatprep.subr.bf16.mxu0 0
  %805 = vmatpush1.bf16.msra.mxu0 0
  %806 = vmatprep.subr.bf16.mxu0 0
  %807 = vmatpush1.bf16.msra.mxu0 0
  %808 = vmatprep.subr.bf16.mxu0 0
  %809 = vmatpush1.bf16.msra.mxu0 0
  %810 = vmatprep.mubr.bf16.mxu0 0
  %811 = vmatmul.mubr.bf16.gmra.mrb[0].mxu0 %v689
  %v812 = vpop.f32.mrb[0].mxu0
  %v813 = vadd.f32 %v728, %v812
  %v814 = vpop.f32.mrb[0].mxu0
  %v815 = vpop.f32.mrb[0].mxu0
  %v816 = vadd.f32 %v728, %v815
  %v817 = vpop.f32.mrb[0].mxu0
  %818 = vmatprep.mubr.bf16.mxu0 0
  %819 = vmatmul.mubr.bf16.gmra.mrb[0].mxu0 %v690
  %v820 = vpop.f32.mrb[0].mxu0
  %v821 = vadd.f32 %v728, %v820
  %v822 = vpop.f32.mrb[0].mxu0
  %v823 = vpop.f32.mrb[0].mxu0
  %v824 = vadd.f32 %v728, %v823
  %v825 = vpop.f32.mrb[0].mxu0
  %826 = vmatprep.mubr.bf16.mxu0 0
  %827 = vmatmul.mubr.bf16.gmra.mrb[0].mxu0 %v691
  %v828 = vpop.f32.mrb[0].mxu0
  %v829 = vadd.f32 %v728, %v828
  %v830 = vpop.f32.mrb[0].mxu0
  %v831 = vpop.f32.mrb[0].mxu0
  %v832 = vadd.f32 %v728, %v831
  %v833 = vpop.f32.mrb[0].mxu0
  %834 = vmatprep.mubr.bf16.mxu0 0
  %835 = vmatmul.mubr.bf16.gmra.mrb[0].mxu0 %v692
  %v836 = vpop.f32.mrb[0].mxu0
  %v837 = vadd.f32 %v728, %v836
  %v838 = vpop.f32.mrb[0].mxu0
  %v839 = vpop.f32.mrb[0].mxu0
  %v840 = vadd.f32 %v728, %v839
  %v841 = vpop.f32.mrb[0].mxu0
  %842 = vmatprep.mubr.bf16.mxu0 0
  %843 = vmatmul.mubr.bf16.gmra.mrb[0].mxu0 %v693
  %v844 = vpop.f32.mrb[0].mxu0
  %v845 = vadd.f32 %v728, %v844
  %v846 = vpop.f32.mrb[0].mxu0
  %v847 = vpop.f32.mrb[0].mxu0
  %v848 = vadd.f32 %v728, %v847
  %v849 = vpop.f32.mrb[0].mxu0
  %850 = vmatprep.mubr.bf16.mxu0 0
  %851 = vmatmul.mubr.bf16.gmra.mrb[0].mxu0 %v694
  %v852 = vpop.f32.mrb[0].mxu0
  %v853 = vadd.f32 %v728, %v852
  %v854 = vpop.f32.mrb[0].mxu0
  %v855 = vpop.f32.mrb[0].mxu0
  %v856 = vadd.f32 %v728, %v855
  %v857 = vpop.f32.mrb[0].mxu0
  %858 = vmatprep.mubr.bf16.mxu0 0
  %859 = vmatmul.mubr.bf16.gmra.mrb[0].mxu0 %v695
  %v860 = vpop.f32.mrb[0].mxu0
  %v861 = vadd.f32 %v728, %v860
  %v862 = vpop.f32.mrb[0].mxu0
  %v863 = vpop.f32.mrb[0].mxu0
  %v864 = vadd.f32 %v728, %v863
  %v865 = vpop.f32.mrb[0].mxu0
  %866 = vmatprep.mubr.bf16.mxu0 0
  %867 = vmatmul.mubr.bf16.gmra.mrb[0].mxu0 %v696
  %v868 = vpop.f32.mrb[0].mxu0
  %v869 = vadd.f32 %v728, %v868
  %v870 = vpop.f32.mrb[0].mxu0
  %v871 = vpop.f32.mrb[0].mxu0
  %v872 = vadd.f32 %v728, %v871
  %v873 = vpop.f32.mrb[0].mxu0
  %874 = vmatprep.mubr.bf16.mxu0 0
  %875 = vmatmul.mubr.bf16.gmra.mrb[0].mxu0 %v697
  %v876 = vpop.f32.mrb[0].mxu0
  %v877 = vadd.f32 %v728, %v876
  %v878 = vpop.f32.mrb[0].mxu0
  %v879 = vpop.f32.mrb[0].mxu0
  %v880 = vadd.f32 %v728, %v879
  %v881 = vpop.f32.mrb[0].mxu0
  %882 = vmatprep.mubr.bf16.mxu0 0
  %883 = vmatmul.mubr.bf16.gmra.mrb[0].mxu0 %v698
  %v884 = vpop.f32.mrb[0].mxu0
  %v885 = vadd.f32 %v728, %v884
  %v886 = vpop.f32.mrb[0].mxu0
  %v887 = vpop.f32.mrb[0].mxu0
  %v888 = vadd.f32 %v728, %v887
  %v889 = vpop.f32.mrb[0].mxu0
  %890 = vmatprep.mubr.bf16.mxu0 0
  %891 = vmatmul.mubr.bf16.gmra.mrb[0].mxu0 %v699
  %v892 = vpop.f32.mrb[0].mxu0
  %v893 = vadd.f32 %v728, %v892
  %v894 = vpop.f32.mrb[0].mxu0
  %v895 = vpop.f32.mrb[0].mxu0
  %v896 = vadd.f32 %v728, %v895
  %v897 = vpop.f32.mrb[0].mxu0
  %898 = vmatprep.mubr.bf16.mxu0 0
  %899 = vmatmul.mubr.bf16.gmra.mrb[0].mxu0 %v700
  %v900 = vpop.f32.mrb[0].mxu0
  %v901 = vadd.f32 %v728, %v900
  %v902 = vpop.f32.mrb[0].mxu0
  %v903 = vpop.f32.mrb[0].mxu0
  %v904 = vadd.f32 %v728, %v903
  %v905 = vpop.f32.mrb[0].mxu0
  %906 = vmatprep.mubr.bf16.mxu0 0
  %907 = vmatmul.mubr.bf16.gmra.mrb[0].mxu0 %v701
  %v908 = vpop.f32.mrb[0].mxu0
  %v909 = vadd.f32 %v728, %v908
  %v910 = vpop.f32.mrb[0].mxu0
  %v911 = vpop.f32.mrb[0].mxu0
  %v912 = vadd.f32 %v728, %v911
  %v913 = vpop.f32.mrb[0].mxu0
  %914 = vmatprep.mubr.bf16.mxu0 0
  %915 = vmatmul.mubr.bf16.gmra.mrb[0].mxu0 %v702
  %v916 = vpop.f32.mrb[0].mxu0
  %v917 = vadd.f32 %v728, %v916
  %v918 = vpop.f32.mrb[0].mxu0
  %v919 = vpop.f32.mrb[0].mxu0
  %v920 = vadd.f32 %v728, %v919
  %v921 = vpop.f32.mrb[0].mxu0
  %922 = vmatprep.mubr.bf16.mxu0 0
  %923 = vmatmul.mubr.bf16.gmra.mrb[0].mxu0 %v703
  %v924 = vpop.f32.mrb[0].mxu0
  %v925 = vadd.f32 %v728, %v924
  %v926 = vpop.f32.mrb[0].mxu0
  %v927 = vpop.f32.mrb[0].mxu0
  %v928 = vadd.f32 %v728, %v927
  %v929 = vpop.f32.mrb[0].mxu0
  %930 = vmatprep.mubr.bf16.mxu0 0
  %931 = vmatmul.mubr.bf16.gmra.mrb[0].mxu0 %v704
  %v932 = vpop.f32.mrb[0].mxu0
  %v933 = vadd.f32 %v728, %v932
  %v934 = vpop.f32.mrb[0].mxu0
  %v935 = vpop.f32.mrb[0].mxu0
  %v936 = vadd.f32 %v728, %v935
  %v937 = vpop.f32.mrb[0].mxu0
  %938 = vdwg.mxu0
  %v939 = vmax.f32 %v813, 0.0
  %v940 = vmax.f32 %v816, 0.0
  %v941 = vmax.f32 %v821, 0.0
  %v942 = vmax.f32 %v824, 0.0
  %v943 = vmax.f32 %v829, 0.0
  %v944 = vmax.f32 %v832, 0.0
  %v945 = vmax.f32 %v837, 0.0
  %v946 = vmax.f32 %v840, 0.0
  %v947 = vmax.f32 %v845, 0.0
  %v948 = vmax.f32 %v848, 0.0
  %v949 = vmax.f32 %v853, 0.0
  %v950 = vmax.f32 %v856, 0.0
  %v951 = vmax.f32 %v861, 0.0
  %v952 = vmax.f32 %v864, 0.0
  %v953 = vmax.f32 %v869, 0.0
  %v954 = vmax.f32 %v872, 0.0
  %v955 = vmax.f32 %v877, 0.0
  %v956 = vmax.f32 %v880, 0.0
  %v957 = vmax.f32 %v885, 0.0
  %v958 = vmax.f32 %v888, 0.0
  %v959 = vmax.f32 %v893, 0.0
  %v960 = vmax.f32 %v896, 0.0
  %v961 = vmax.f32 %v901, 0.0
  %v962 = vmax.f32 %v904, 0.0
  %v963 = vmax.f32 %v909, 0.0
  %v964 = vmax.f32 %v912, 0.0
  %v965 = vmax.f32 %v917, 0.0
  %v966 = vmax.f32 %v920, 0.0
  %v967 = vmax.f32 %v925, 0.0
  %v968 = vmax.f32 %v928, 0.0
  %v969 = vmax.f32 %v933, 0.0
  %v970 = vmax.f32 %v936, 0.0
  %v971 = vpack.c.bf16 %v940, %v939
  %v972 = vpack.c.bf16 %v942, %v941
  %v973 = vpack.c.bf16 %v944, %v943
  %v974 = vpack.c.bf16 %v946, %v945
  %v975 = vpack.c.bf16 %v948, %v947
  %v976 = vpack.c.bf16 %v950, %v949
  %v977 = vpack.c.bf16 %v952, %v951
  %v978 = vpack.c.bf16 %v954, %v953
  %v979 = vpack.c.bf16 %v956, %v955
  %v980 = vpack.c.bf16 %v958, %v957
  %v981 = vpack.c.bf16 %v960, %v959
  %v982 = vpack.c.bf16 %v962, %v961
  %v983 = vpack.c.bf16 %v964, %v963
  %v984 = vpack.c.bf16 %v966, %v965
  %v985 = vpack.c.bf16 %v968, %v967
  %v986 = vpack.c.bf16 %v970, %v969
  %s987 = scalar_lea.vmem %s1, 192
  %v988 = vld [vmem:[%s987] sm:$0xf]
  %v989 = vld [vmem:[%s987 + $0x4] sm:$0xf]
  %v990 = vld [vmem:[%s987 + $0x8] sm:$0xf]
  %v991 = vld [vmem:[%s987 + $0xc] sm:$0xf]
  %v992 = vld [vmem:[%s987 + $0x10] sm:$0xf]
  %v993 = vld [vmem:[%s987 + $0x14] sm:$0xf]
  %v994 = vld [vmem:[%s987 + $0x18] sm:$0xf]
  %v995 = vld [vmem:[%s987 + $0x1c] sm:$0xf]
  %v996 = vld [vmem:[%s987 + $0x20] sm:$0xf]
  %v997 = vld [vmem:[%s987 + $0x24] sm:$0xf]
  %v998 = vld [vmem:[%s987 + $0x28] sm:$0xf]
  %v999 = vld [vmem:[%s987 + $0x2c] sm:$0xf]
  %v1000 = vld [vmem:[%s987 + $0x30] sm:$0xf]
  %v1001 = vld [vmem:[%s987 + $0x34] sm:$0xf]
  %v1002 = vld [vmem:[%s987 + $0x38] sm:$0xf]
  %v1003 = vld [vmem:[%s987 + $0x3c] sm:$0xf]
  %s1004 = scalar_lea.vmem %s2, 3
  %v1005 = vld [vmem:[%s1004] sm:$0x1]
  %v1007 = vlaneseq
  %v1008 = vshrl.u32 %v1007, 7
  %v1009 = vsub.s32 0, %v1008
  %v1010 = vrot.slane %v1005, %v1009
  %v1028 = vunpack.c.l.b16 %v988
  %v1029 = vunpack.c.l.b16 %v989
  %v1030 = vunpack.c.l.b16 %v990
  %v1031 = vunpack.c.l.b16 %v991
  %v1032 = vunpack.c.l.b16 %v992
  %v1033 = vunpack.c.l.b16 %v993
  %v1034 = vunpack.c.l.b16 %v994
  %v1035 = vunpack.c.l.b16 %v995
  %v1036 = vunpack.c.l.b16 %v996
  %v1037 = vunpack.c.l.b16 %v997
  %v1038 = vunpack.c.l.b16 %v998
  %v1039 = vunpack.c.l.b16 %v999
  %v1040 = vunpack.c.l.b16 %v1000
  %v1041 = vunpack.c.l.b16 %v1001
  %v1042 = vunpack.c.l.b16 %v1002
  %v1043 = vunpack.c.l.b16 %v1003
  %v1044 = vpack.c.b16 %v1029, %v1028
  %v1045 = vpack.c.b16 %v1031, %v1030
  %v1046 = vpack.c.b16 %v1033, %v1032
  %v1047 = vpack.c.b16 %v1035, %v1034
  %v1048 = vpack.c.b16 %v1037, %v1036
  %v1049 = vpack.c.b16 %v1039, %v1038
  %v1050 = vpack.c.b16 %v1041, %v1040
  %v1051 = vpack.c.b16 %v1043, %v1042
  %1060 = vmatprep.subr.bf16.mxu0 0
  %1061 = vmatpush1.bf16.msra.mxu0 %v1044
  %1062 = vmatprep.subr.bf16.mxu0 0
  %1063 = vmatpush1.bf16.msra.mxu0 %v1045
  %1064 = vmatprep.subr.bf16.mxu0 0
  %1065 = vmatpush1.bf16.msra.mxu0 %v1046
  %1066 = vmatprep.subr.bf16.mxu0 0
  %1067 = vmatpush1.bf16.msra.mxu0 %v1047
  %1068 = vmatprep.subr.bf16.mxu0 0
  %1069 = vmatpush1.bf16.msra.mxu0 %v1048
  %1070 = vmatprep.subr.bf16.mxu0 0
  %1071 = vmatpush1.bf16.msra.mxu0 %v1049
  %1072 = vmatprep.subr.bf16.mxu0 0
  %1073 = vmatpush1.bf16.msra.mxu0 %v1050
  %1074 = vmatprep.subr.bf16.mxu0 0
  %1075 = vmatpush1.bf16.msra.mxu0 %v1051
  %1076 = vmatprep.subr.bf16.mxu0 0
  %1077 = vmatpush1.bf16.msra.mxu0 0
  %1078 = vmatprep.subr.bf16.mxu0 0
  %1079 = vmatpush1.bf16.msra.mxu0 0
  %1080 = vmatprep.subr.bf16.mxu0 0
  %1081 = vmatpush1.bf16.msra.mxu0 0
  %1082 = vmatprep.subr.bf16.mxu0 0
  %1083 = vmatpush1.bf16.msra.mxu0 0
  %1084 = vmatprep.subr.bf16.mxu0 0
  %1085 = vmatpush1.bf16.msra.mxu0 0
  %1086 = vmatprep.subr.bf16.mxu0 0
  %1087 = vmatpush1.bf16.msra.mxu0 0
  %1088 = vmatprep.subr.bf16.mxu0 0
  %1089 = vmatpush1.bf16.msra.mxu0 0
  %1090 = vmatprep.subr.bf16.mxu0 0
  %1091 = vmatpush1.bf16.msra.mxu0 0
  %1092 = vmatprep.mubr.bf16.mxu0 0
  %1093 = vmatmul.mubr.bf16.gmra.mrb[0].mxu0 %v971
  %v1094 = vpop.f32.mrb[0].mxu0
  %v1095 = vadd.f32 %v1010, %v1094
  %v1096 = vpop.f32.mrb[0].mxu0
  %v1097 = vpop.f32.mrb[0].mxu0
  %v1098 = vadd.f32 %v1010, %v1097
  %v1099 = vpop.f32.mrb[0].mxu0
  %1100 = vmatprep.mubr.bf16.mxu0 0
  %1101 = vmatmul.mubr.bf16.gmra.mrb[0].mxu0 %v972
  %v1102 = vpop.f32.mrb[0].mxu0
  %v1103 = vadd.f32 %v1010, %v1102
  %v1104 = vpop.f32.mrb[0].mxu0
  %v1105 = vpop.f32.mrb[0].mxu0
  %v1106 = vadd.f32 %v1010, %v1105
  %v1107 = vpop.f32.mrb[0].mxu0
  %1108 = vmatprep.mubr.bf16.mxu0 0
  %1109 = vmatmul.mubr.bf16.gmra.mrb[0].mxu0 %v973
  %v1110 = vpop.f32.mrb[0].mxu0
  %v1111 = vadd.f32 %v1010, %v1110
  %v1112 = vpop.f32.mrb[0].mxu0
  %v1113 = vpop.f32.mrb[0].mxu0
  %v1114 = vadd.f32 %v1010, %v1113
  %v1115 = vpop.f32.mrb[0].mxu0
  %1116 = vmatprep.mubr.bf16.mxu0 0
  %1117 = vmatmul.mubr.bf16.gmra.mrb[0].mxu0 %v974
  %v1118 = vpop.f32.mrb[0].mxu0
  %v1119 = vadd.f32 %v1010, %v1118
  %v1120 = vpop.f32.mrb[0].mxu0
  %v1121 = vpop.f32.mrb[0].mxu0
  %v1122 = vadd.f32 %v1010, %v1121
  %v1123 = vpop.f32.mrb[0].mxu0
  %1124 = vmatprep.mubr.bf16.mxu0 0
  %1125 = vmatmul.mubr.bf16.gmra.mrb[0].mxu0 %v975
  %v1126 = vpop.f32.mrb[0].mxu0
  %v1127 = vadd.f32 %v1010, %v1126
  %v1128 = vpop.f32.mrb[0].mxu0
  %v1129 = vpop.f32.mrb[0].mxu0
  %v1130 = vadd.f32 %v1010, %v1129
  %v1131 = vpop.f32.mrb[0].mxu0
  %1132 = vmatprep.mubr.bf16.mxu0 0
  %1133 = vmatmul.mubr.bf16.gmra.mrb[0].mxu0 %v976
  %v1134 = vpop.f32.mrb[0].mxu0
  %v1135 = vadd.f32 %v1010, %v1134
  %v1136 = vpop.f32.mrb[0].mxu0
  %v1137 = vpop.f32.mrb[0].mxu0
  %v1138 = vadd.f32 %v1010, %v1137
  %v1139 = vpop.f32.mrb[0].mxu0
  %1140 = vmatprep.mubr.bf16.mxu0 0
  %1141 = vmatmul.mubr.bf16.gmra.mrb[0].mxu0 %v977
  %v1142 = vpop.f32.mrb[0].mxu0
  %v1143 = vadd.f32 %v1010, %v1142
  %v1144 = vpop.f32.mrb[0].mxu0
  %v1145 = vpop.f32.mrb[0].mxu0
  %v1146 = vadd.f32 %v1010, %v1145
  %v1147 = vpop.f32.mrb[0].mxu0
  %1148 = vmatprep.mubr.bf16.mxu0 0
  %1149 = vmatmul.mubr.bf16.gmra.mrb[0].mxu0 %v978
  %v1150 = vpop.f32.mrb[0].mxu0
  %v1151 = vadd.f32 %v1010, %v1150
  %v1152 = vpop.f32.mrb[0].mxu0
  %v1153 = vpop.f32.mrb[0].mxu0
  %v1154 = vadd.f32 %v1010, %v1153
  %v1155 = vpop.f32.mrb[0].mxu0
  %1156 = vmatprep.mubr.bf16.mxu0 0
  %1157 = vmatmul.mubr.bf16.gmra.mrb[0].mxu0 %v979
  %v1158 = vpop.f32.mrb[0].mxu0
  %v1159 = vadd.f32 %v1010, %v1158
  %v1160 = vpop.f32.mrb[0].mxu0
  %v1161 = vpop.f32.mrb[0].mxu0
  %v1162 = vadd.f32 %v1010, %v1161
  %v1163 = vpop.f32.mrb[0].mxu0
  %1164 = vmatprep.mubr.bf16.mxu0 0
  %1165 = vmatmul.mubr.bf16.gmra.mrb[0].mxu0 %v980
  %v1166 = vpop.f32.mrb[0].mxu0
  %v1167 = vadd.f32 %v1010, %v1166
  %v1168 = vpop.f32.mrb[0].mxu0
  %v1169 = vpop.f32.mrb[0].mxu0
  %v1170 = vadd.f32 %v1010, %v1169
  %v1171 = vpop.f32.mrb[0].mxu0
  %1172 = vmatprep.mubr.bf16.mxu0 0
  %1173 = vmatmul.mubr.bf16.gmra.mrb[0].mxu0 %v981
  %v1174 = vpop.f32.mrb[0].mxu0
  %v1175 = vadd.f32 %v1010, %v1174
  %v1176 = vpop.f32.mrb[0].mxu0
  %v1177 = vpop.f32.mrb[0].mxu0
  %v1178 = vadd.f32 %v1010, %v1177
  %v1179 = vpop.f32.mrb[0].mxu0
  %1180 = vmatprep.mubr.bf16.mxu0 0
  %1181 = vmatmul.mubr.bf16.gmra.mrb[0].mxu0 %v982
  %v1182 = vpop.f32.mrb[0].mxu0
  %v1183 = vadd.f32 %v1010, %v1182
  %v1184 = vpop.f32.mrb[0].mxu0
  %v1185 = vpop.f32.mrb[0].mxu0
  %v1186 = vadd.f32 %v1010, %v1185
  %v1187 = vpop.f32.mrb[0].mxu0
  %1188 = vmatprep.mubr.bf16.mxu0 0
  %1189 = vmatmul.mubr.bf16.gmra.mrb[0].mxu0 %v983
  %v1190 = vpop.f32.mrb[0].mxu0
  %v1191 = vadd.f32 %v1010, %v1190
  %v1192 = vpop.f32.mrb[0].mxu0
  %v1193 = vpop.f32.mrb[0].mxu0
  %v1194 = vadd.f32 %v1010, %v1193
  %v1195 = vpop.f32.mrb[0].mxu0
  %1196 = vmatprep.mubr.bf16.mxu0 0
  %1197 = vmatmul.mubr.bf16.gmra.mrb[0].mxu0 %v984
  %v1198 = vpop.f32.mrb[0].mxu0
  %v1199 = vadd.f32 %v1010, %v1198
  %v1200 = vpop.f32.mrb[0].mxu0
  %v1201 = vpop.f32.mrb[0].mxu0
  %v1202 = vadd.f32 %v1010, %v1201
  %v1203 = vpop.f32.mrb[0].mxu0
  %1204 = vmatprep.mubr.bf16.mxu0 0
  %1205 = vmatmul.mubr.bf16.gmra.mrb[0].mxu0 %v985
  %v1206 = vpop.f32.mrb[0].mxu0
  %v1207 = vadd.f32 %v1010, %v1206
  %v1208 = vpop.f32.mrb[0].mxu0
  %v1209 = vpop.f32.mrb[0].mxu0
  %v1210 = vadd.f32 %v1010, %v1209
  %v1211 = vpop.f32.mrb[0].mxu0
  %1212 = vmatprep.mubr.bf16.mxu0 0
  %1213 = vmatmul.mubr.bf16.gmra.mrb[0].mxu0 %v986
  %v1214 = vpop.f32.mrb[0].mxu0
  %v1215 = vadd.f32 %v1010, %v1214
  %v1216 = vpop.f32.mrb[0].mxu0
  %v1217 = vpop.f32.mrb[0].mxu0
  %v1218 = vadd.f32 %v1010, %v1217
  %v1219 = vpop.f32.mrb[0].mxu0
  %1220 = vdwg.mxu0
  %v1221 = vmax.f32 %v1095, 0.0
  %v1222 = vmax.f32 %v1098, 0.0
  %v1223 = vmax.f32 %v1103, 0.0
  %v1224 = vmax.f32 %v1106, 0.0
  %v1225 = vmax.f32 %v1111, 0.0
  %v1226 = vmax.f32 %v1114, 0.0
  %v1227 = vmax.f32 %v1119, 0.0
  %v1228 = vmax.f32 %v1122, 0.0
  %v1229 = vmax.f32 %v1127, 0.0
  %v1230 = vmax.f32 %v1130, 0.0
  %v1231 = vmax.f32 %v1135, 0.0
  %v1232 = vmax.f32 %v1138, 0.0
  %v1233 = vmax.f32 %v1143, 0.0
  %v1234 = vmax.f32 %v1146, 0.0
  %v1235 = vmax.f32 %v1151, 0.0
  %v1236 = vmax.f32 %v1154, 0.0
  %v1237 = vmax.f32 %v1159, 0.0
  %v1238 = vmax.f32 %v1162, 0.0
  %v1239 = vmax.f32 %v1167, 0.0
  %v1240 = vmax.f32 %v1170, 0.0
  %v1241 = vmax.f32 %v1175, 0.0
  %v1242 = vmax.f32 %v1178, 0.0
  %v1243 = vmax.f32 %v1183, 0.0
  %v1244 = vmax.f32 %v1186, 0.0
  %v1245 = vmax.f32 %v1191, 0.0
  %v1246 = vmax.f32 %v1194, 0.0
  %v1247 = vmax.f32 %v1199, 0.0
  %v1248 = vmax.f32 %v1202, 0.0
  %v1249 = vmax.f32 %v1207, 0.0
  %v1250 = vmax.f32 %v1210, 0.0
  %v1251 = vmax.f32 %v1215, 0.0
  %v1252 = vmax.f32 %v1218, 0.0
  %v1253 = vpack.c.bf16 %v1222, %v1221
  %v1254 = vpack.c.bf16 %v1224, %v1223
  %v1255 = vpack.c.bf16 %v1226, %v1225
  %v1256 = vpack.c.bf16 %v1228, %v1227
  %v1257 = vpack.c.bf16 %v1230, %v1229
  %v1258 = vpack.c.bf16 %v1232, %v1231
  %v1259 = vpack.c.bf16 %v1234, %v1233
  %v1260 = vpack.c.bf16 %v1236, %v1235
  %v1261 = vpack.c.bf16 %v1238, %v1237
  %v1262 = vpack.c.bf16 %v1240, %v1239
  %v1263 = vpack.c.bf16 %v1242, %v1241
  %v1264 = vpack.c.bf16 %v1244, %v1243
  %v1265 = vpack.c.bf16 %v1246, %v1245
  %v1266 = vpack.c.bf16 %v1248, %v1247
  %v1267 = vpack.c.bf16 %v1250, %v1249
  %v1268 = vpack.c.bf16 %v1252, %v1251
  %s1269 = scalar_lea.vmem %s1, 256
  %v1270 = vld [vmem:[%s1269] sm:$0xf]
  %v1271 = vld [vmem:[%s1269 + $0x4] sm:$0xf]
  %v1272 = vld [vmem:[%s1269 + $0x8] sm:$0xf]
  %v1273 = vld [vmem:[%s1269 + $0xc] sm:$0xf]
  %v1274 = vld [vmem:[%s1269 + $0x10] sm:$0xf]
  %v1275 = vld [vmem:[%s1269 + $0x14] sm:$0xf]
  %v1276 = vld [vmem:[%s1269 + $0x18] sm:$0xf]
  %v1277 = vld [vmem:[%s1269 + $0x1c] sm:$0xf]
  %v1278 = vld [vmem:[%s1269 + $0x20] sm:$0xf]
  %v1279 = vld [vmem:[%s1269 + $0x24] sm:$0xf]
  %v1280 = vld [vmem:[%s1269 + $0x28] sm:$0xf]
  %v1281 = vld [vmem:[%s1269 + $0x2c] sm:$0xf]
  %v1282 = vld [vmem:[%s1269 + $0x30] sm:$0xf]
  %v1283 = vld [vmem:[%s1269 + $0x34] sm:$0xf]
  %v1284 = vld [vmem:[%s1269 + $0x38] sm:$0xf]
  %v1285 = vld [vmem:[%s1269 + $0x3c] sm:$0xf]
  %s1286 = scalar_lea.vmem %s2, 4
  %v1287 = vld [vmem:[%s1286] sm:$0x1]
  %v1289 = vlaneseq
  %v1290 = vshrl.u32 %v1289, 7
  %v1291 = vsub.s32 0, %v1290
  %v1292 = vrot.slane %v1287, %v1291
  %v1310 = vunpack.c.l.b16 %v1270
  %v1311 = vunpack.c.l.b16 %v1271
  %v1312 = vunpack.c.l.b16 %v1272
  %v1313 = vunpack.c.l.b16 %v1273
  %v1314 = vunpack.c.l.b16 %v1274
  %v1315 = vunpack.c.l.b16 %v1275
  %v1316 = vunpack.c.l.b16 %v1276
  %v1317 = vunpack.c.l.b16 %v1277
  %v1318 = vunpack.c.l.b16 %v1278
  %v1319 = vunpack.c.l.b16 %v1279
  %v1320 = vunpack.c.l.b16 %v1280
  %v1321 = vunpack.c.l.b16 %v1281
  %v1322 = vunpack.c.l.b16 %v1282
  %v1323 = vunpack.c.l.b16 %v1283
  %v1324 = vunpack.c.l.b16 %v1284
  %v1325 = vunpack.c.l.b16 %v1285
  %v1326 = vpack.c.b16 %v1311, %v1310
  %v1327 = vpack.c.b16 %v1313, %v1312
  %v1328 = vpack.c.b16 %v1315, %v1314
  %v1329 = vpack.c.b16 %v1317, %v1316
  %v1330 = vpack.c.b16 %v1319, %v1318
  %v1331 = vpack.c.b16 %v1321, %v1320
  %v1332 = vpack.c.b16 %v1323, %v1322
  %v1333 = vpack.c.b16 %v1325, %v1324
  %1342 = vmatprep.subr.bf16.mxu0 0
  %1343 = vmatpush1.bf16.msra.mxu0 %v1326
  %1344 = vmatprep.subr.bf16.mxu0 0
  %1345 = vmatpush1.bf16.msra.mxu0 %v1327
  %1346 = vmatprep.subr.bf16.mxu0 0
  %1347 = vmatpush1.bf16.msra.mxu0 %v1328
  %1348 = vmatprep.subr.bf16.mxu0 0
  %1349 = vmatpush1.bf16.msra.mxu0 %v1329
  %1350 = vmatprep.subr.bf16.mxu0 0
  %1351 = vmatpush1.bf16.msra.mxu0 %v1330
  %1352 = vmatprep.subr.bf16.mxu0 0
  %1353 = vmatpush1.bf16.msra.mxu0 %v1331
  %1354 = vmatprep.subr.bf16.mxu0 0
  %1355 = vmatpush1.bf16.msra.mxu0 %v1332
  %1356 = vmatprep.subr.bf16.mxu0 0
  %1357 = vmatpush1.bf16.msra.mxu0 %v1333
  %1358 = vmatprep.subr.bf16.mxu0 0
  %1359 = vmatpush1.bf16.msra.mxu0 0
  %1360 = vmatprep.subr.bf16.mxu0 0
  %1361 = vmatpush1.bf16.msra.mxu0 0
  %1362 = vmatprep.subr.bf16.mxu0 0
  %1363 = vmatpush1.bf16.msra.mxu0 0
  %1364 = vmatprep.subr.bf16.mxu0 0
  %1365 = vmatpush1.bf16.msra.mxu0 0
  %1366 = vmatprep.subr.bf16.mxu0 0
  %1367 = vmatpush1.bf16.msra.mxu0 0
  %1368 = vmatprep.subr.bf16.mxu0 0
  %1369 = vmatpush1.bf16.msra.mxu0 0
  %1370 = vmatprep.subr.bf16.mxu0 0
  %1371 = vmatpush1.bf16.msra.mxu0 0
  %1372 = vmatprep.subr.bf16.mxu0 0
  %1373 = vmatpush1.bf16.msra.mxu0 0
  %1374 = vmatprep.mubr.bf16.mxu0 0
  %1375 = vmatmul.mubr.bf16.gmra.mrb[0].mxu0 %v1253
  %v1376 = vpop.f32.mrb[0].mxu0
  %v1377 = vadd.f32 %v1292, %v1376
  %v1378 = vpop.f32.mrb[0].mxu0
  %v1379 = vpop.f32.mrb[0].mxu0
  %v1380 = vadd.f32 %v1292, %v1379
  %v1381 = vpop.f32.mrb[0].mxu0
  %1382 = vmatprep.mubr.bf16.mxu0 0
  %1383 = vmatmul.mubr.bf16.gmra.mrb[0].mxu0 %v1254
  %v1384 = vpop.f32.mrb[0].mxu0
  %v1385 = vadd.f32 %v1292, %v1384
  %v1386 = vpop.f32.mrb[0].mxu0
  %v1387 = vpop.f32.mrb[0].mxu0
  %v1388 = vadd.f32 %v1292, %v1387
  %v1389 = vpop.f32.mrb[0].mxu0
  %1390 = vmatprep.mubr.bf16.mxu0 0
  %1391 = vmatmul.mubr.bf16.gmra.mrb[0].mxu0 %v1255
  %v1392 = vpop.f32.mrb[0].mxu0
  %v1393 = vadd.f32 %v1292, %v1392
  %v1394 = vpop.f32.mrb[0].mxu0
  %v1395 = vpop.f32.mrb[0].mxu0
  %v1396 = vadd.f32 %v1292, %v1395
  %v1397 = vpop.f32.mrb[0].mxu0
  %1398 = vmatprep.mubr.bf16.mxu0 0
  %1399 = vmatmul.mubr.bf16.gmra.mrb[0].mxu0 %v1256
  %v1400 = vpop.f32.mrb[0].mxu0
  %v1401 = vadd.f32 %v1292, %v1400
  %v1402 = vpop.f32.mrb[0].mxu0
  %v1403 = vpop.f32.mrb[0].mxu0
  %v1404 = vadd.f32 %v1292, %v1403
  %v1405 = vpop.f32.mrb[0].mxu0
  %1406 = vmatprep.mubr.bf16.mxu0 0
  %1407 = vmatmul.mubr.bf16.gmra.mrb[0].mxu0 %v1257
  %v1408 = vpop.f32.mrb[0].mxu0
  %v1409 = vadd.f32 %v1292, %v1408
  %v1410 = vpop.f32.mrb[0].mxu0
  %v1411 = vpop.f32.mrb[0].mxu0
  %v1412 = vadd.f32 %v1292, %v1411
  %v1413 = vpop.f32.mrb[0].mxu0
  %1414 = vmatprep.mubr.bf16.mxu0 0
  %1415 = vmatmul.mubr.bf16.gmra.mrb[0].mxu0 %v1258
  %v1416 = vpop.f32.mrb[0].mxu0
  %v1417 = vadd.f32 %v1292, %v1416
  %v1418 = vpop.f32.mrb[0].mxu0
  %v1419 = vpop.f32.mrb[0].mxu0
  %v1420 = vadd.f32 %v1292, %v1419
  %v1421 = vpop.f32.mrb[0].mxu0
  %1422 = vmatprep.mubr.bf16.mxu0 0
  %1423 = vmatmul.mubr.bf16.gmra.mrb[0].mxu0 %v1259
  %v1424 = vpop.f32.mrb[0].mxu0
  %v1425 = vadd.f32 %v1292, %v1424
  %v1426 = vpop.f32.mrb[0].mxu0
  %v1427 = vpop.f32.mrb[0].mxu0
  %v1428 = vadd.f32 %v1292, %v1427
  %v1429 = vpop.f32.mrb[0].mxu0
  %1430 = vmatprep.mubr.bf16.mxu0 0
  %1431 = vmatmul.mubr.bf16.gmra.mrb[0].mxu0 %v1260
  %v1432 = vpop.f32.mrb[0].mxu0
  %v1433 = vadd.f32 %v1292, %v1432
  %v1434 = vpop.f32.mrb[0].mxu0
  %v1435 = vpop.f32.mrb[0].mxu0
  %v1436 = vadd.f32 %v1292, %v1435
  %v1437 = vpop.f32.mrb[0].mxu0
  %1438 = vmatprep.mubr.bf16.mxu0 0
  %1439 = vmatmul.mubr.bf16.gmra.mrb[0].mxu0 %v1261
  %v1440 = vpop.f32.mrb[0].mxu0
  %v1441 = vadd.f32 %v1292, %v1440
  %v1442 = vpop.f32.mrb[0].mxu0
  %v1443 = vpop.f32.mrb[0].mxu0
  %v1444 = vadd.f32 %v1292, %v1443
  %v1445 = vpop.f32.mrb[0].mxu0
  %1446 = vmatprep.mubr.bf16.mxu0 0
  %1447 = vmatmul.mubr.bf16.gmra.mrb[0].mxu0 %v1262
  %v1448 = vpop.f32.mrb[0].mxu0
  %v1449 = vadd.f32 %v1292, %v1448
  %v1450 = vpop.f32.mrb[0].mxu0
  %v1451 = vpop.f32.mrb[0].mxu0
  %v1452 = vadd.f32 %v1292, %v1451
  %v1453 = vpop.f32.mrb[0].mxu0
  %1454 = vmatprep.mubr.bf16.mxu0 0
  %1455 = vmatmul.mubr.bf16.gmra.mrb[0].mxu0 %v1263
  %v1456 = vpop.f32.mrb[0].mxu0
  %v1457 = vadd.f32 %v1292, %v1456
  %v1458 = vpop.f32.mrb[0].mxu0
  %v1459 = vpop.f32.mrb[0].mxu0
  %v1460 = vadd.f32 %v1292, %v1459
  %v1461 = vpop.f32.mrb[0].mxu0
  %1462 = vmatprep.mubr.bf16.mxu0 0
  %1463 = vmatmul.mubr.bf16.gmra.mrb[0].mxu0 %v1264
  %v1464 = vpop.f32.mrb[0].mxu0
  %v1465 = vadd.f32 %v1292, %v1464
  %v1466 = vpop.f32.mrb[0].mxu0
  %v1467 = vpop.f32.mrb[0].mxu0
  %v1468 = vadd.f32 %v1292, %v1467
  %v1469 = vpop.f32.mrb[0].mxu0
  %1470 = vmatprep.mubr.bf16.mxu0 0
  %1471 = vmatmul.mubr.bf16.gmra.mrb[0].mxu0 %v1265
  %v1472 = vpop.f32.mrb[0].mxu0
  %v1473 = vadd.f32 %v1292, %v1472
  %v1474 = vpop.f32.mrb[0].mxu0
  %v1475 = vpop.f32.mrb[0].mxu0
  %v1476 = vadd.f32 %v1292, %v1475
  %v1477 = vpop.f32.mrb[0].mxu0
  %1478 = vmatprep.mubr.bf16.mxu0 0
  %1479 = vmatmul.mubr.bf16.gmra.mrb[0].mxu0 %v1266
  %v1480 = vpop.f32.mrb[0].mxu0
  %v1481 = vadd.f32 %v1292, %v1480
  %v1482 = vpop.f32.mrb[0].mxu0
  %v1483 = vpop.f32.mrb[0].mxu0
  %v1484 = vadd.f32 %v1292, %v1483
  %v1485 = vpop.f32.mrb[0].mxu0
  %1486 = vmatprep.mubr.bf16.mxu0 0
  %1487 = vmatmul.mubr.bf16.gmra.mrb[0].mxu0 %v1267
  %v1488 = vpop.f32.mrb[0].mxu0
  %v1489 = vadd.f32 %v1292, %v1488
  %v1490 = vpop.f32.mrb[0].mxu0
  %v1491 = vpop.f32.mrb[0].mxu0
  %v1492 = vadd.f32 %v1292, %v1491
  %v1493 = vpop.f32.mrb[0].mxu0
  %1494 = vmatprep.mubr.bf16.mxu0 0
  %1495 = vmatmul.mubr.bf16.gmra.mrb[0].mxu0 %v1268
  %v1496 = vpop.f32.mrb[0].mxu0
  %v1497 = vadd.f32 %v1292, %v1496
  %v1498 = vpop.f32.mrb[0].mxu0
  %v1499 = vpop.f32.mrb[0].mxu0
  %v1500 = vadd.f32 %v1292, %v1499
  %v1501 = vpop.f32.mrb[0].mxu0
  %1502 = vdwg.mxu0
  %v1503 = vtanh.pop %v1377
  %v1504 = vtanh.pop %v1380
  %v1505 = vtanh.pop %v1385
  %v1506 = vtanh.pop %v1388
  %v1507 = vtanh.pop %v1393
  %v1508 = vtanh.pop %v1396
  %v1509 = vtanh.pop %v1401
  %v1510 = vtanh.pop %v1404
  %v1511 = vtanh.pop %v1409
  %v1512 = vtanh.pop %v1412
  %v1513 = vtanh.pop %v1417
  %v1514 = vtanh.pop %v1420
  %v1515 = vtanh.pop %v1425
  %v1516 = vtanh.pop %v1428
  %v1517 = vtanh.pop %v1433
  %v1518 = vtanh.pop %v1436
  %v1519 = vtanh.pop %v1441
  %v1520 = vtanh.pop %v1444
  %v1521 = vtanh.pop %v1449
  %v1522 = vtanh.pop %v1452
  %v1523 = vtanh.pop %v1457
  %v1524 = vtanh.pop %v1460
  %v1525 = vtanh.pop %v1465
  %v1526 = vtanh.pop %v1468
  %v1527 = vtanh.pop %v1473
  %v1528 = vtanh.pop %v1476
  %v1529 = vtanh.pop %v1481
  %v1530 = vtanh.pop %v1484
  %v1531 = vtanh.pop %v1489
  %v1532 = vtanh.pop %v1492
  %v1533 = vtanh.pop %v1497
  %v1534 = vtanh.pop %v1500
  %v1535 = vpack.c.bf16 %v1504, %v1503
  %v1536 = vpack.c.bf16 %v1506, %v1505
  %v1537 = vpack.c.bf16 %v1508, %v1507
  %v1538 = vpack.c.bf16 %v1510, %v1509
  %v1539 = vpack.c.bf16 %v1512, %v1511
  %v1540 = vpack.c.bf16 %v1514, %v1513
  %v1541 = vpack.c.bf16 %v1516, %v1515
  %v1542 = vpack.c.bf16 %v1518, %v1517
  %v1543 = vpack.c.bf16 %v1520, %v1519
  %v1544 = vpack.c.bf16 %v1522, %v1521
  %v1545 = vpack.c.bf16 %v1524, %v1523
  %v1546 = vpack.c.bf16 %v1526, %v1525
  %v1547 = vpack.c.bf16 %v1528, %v1527
  %v1548 = vpack.c.bf16 %v1530, %v1529
  %v1549 = vpack.c.bf16 %v1532, %v1531
  %v1550 = vpack.c.bf16 %v1534, %v1533
  %v1567 = vunpack.c.l.b16 %v1535
  %v1568 = vunpack.c.h.b16 %v1535
  %v1569 = vunpack.c.l.b16 %v1536
  %v1570 = vunpack.c.h.b16 %v1536
  %v1571 = vunpack.c.l.b16 %v1537
  %v1572 = vunpack.c.h.b16 %v1537
  %v1573 = vunpack.c.l.b16 %v1538
  %v1574 = vunpack.c.h.b16 %v1538
  %v1575 = vunpack.c.l.b16 %v1539
  %v1576 = vunpack.c.h.b16 %v1539
  %v1577 = vunpack.c.l.b16 %v1540
  %v1578 = vunpack.c.h.b16 %v1540
  %v1579 = vunpack.c.l.b16 %v1541
  %v1580 = vunpack.c.h.b16 %v1541
  %v1581 = vunpack.c.l.b16 %v1542
  %v1582 = vunpack.c.h.b16 %v1542
  %v1583 = vunpack.c.l.b16 %v1543
  %v1584 = vunpack.c.h.b16 %v1543
  %v1585 = vunpack.c.l.b16 %v1544
  %v1586 = vunpack.c.h.b16 %v1544
  %v1587 = vunpack.c.l.b16 %v1545
  %v1588 = vunpack.c.h.b16 %v1545
  %v1589 = vunpack.c.l.b16 %v1546
  %v1590 = vunpack.c.h.b16 %v1546
  %v1591 = vunpack.c.l.b16 %v1547
  %v1592 = vunpack.c.h.b16 %v1547
  %v1593 = vunpack.c.l.b16 %v1548
  %v1594 = vunpack.c.h.b16 %v1548
  %v1595 = vunpack.c.l.b16 %v1549
  %v1596 = vunpack.c.h.b16 %v1549
  %v1597 = vunpack.c.l.b16 %v1550
  %v1598 = vunpack.c.h.b16 %v1550
  %v1599 = vpack.c.b16 %v1567, %v1567
  %v1600 = vpack.c.b16 %v1568, %v1568
  %v1601 = vpack.c.b16 %v1569, %v1569
  %v1602 = vpack.c.b16 %v1570, %v1570
  %v1603 = vpack.c.b16 %v1571, %v1571
  %v1604 = vpack.c.b16 %v1572, %v1572
  %v1605 = vpack.c.b16 %v1573, %v1573
  %v1606 = vpack.c.b16 %v1574, %v1574
  %v1607 = vpack.c.b16 %v1575, %v1575
  %v1608 = vpack.c.b16 %v1576, %v1576
  %v1609 = vpack.c.b16 %v1577, %v1577
  %v1610 = vpack.c.b16 %v1578, %v1578
  %v1611 = vpack.c.b16 %v1579, %v1579
  %v1612 = vpack.c.b16 %v1580, %v1580
  %v1613 = vpack.c.b16 %v1581, %v1581
  %v1614 = vpack.c.b16 %v1582, %v1582
  %v1615 = vpack.c.b16 %v1583, %v1583
  %v1616 = vpack.c.b16 %v1584, %v1584
  %v1617 = vpack.c.b16 %v1585, %v1585
  %v1618 = vpack.c.b16 %v1586, %v1586
  %v1619 = vpack.c.b16 %v1587, %v1587
  %v1620 = vpack.c.b16 %v1588, %v1588
  %v1621 = vpack.c.b16 %v1589, %v1589
  %v1622 = vpack.c.b16 %v1590, %v1590
  %v1623 = vpack.c.b16 %v1591, %v1591
  %v1624 = vpack.c.b16 %v1592, %v1592
  %v1625 = vpack.c.b16 %v1593, %v1593
  %v1626 = vpack.c.b16 %v1594, %v1594
  %v1627 = vpack.c.b16 %v1595, %v1595
  %v1628 = vpack.c.b16 %v1596, %v1596
  %v1629 = vpack.c.b16 %v1597, %v1597
  %v1630 = vpack.c.b16 %v1598, %v1598
  %1663 = vst [vmem:[%s3] sm:$0xf] %v1599
  %1664 = vst [vmem:[%s3 + $0x4] sm:$0xf] %v1600
  %1665 = vst [vmem:[%s3 + $0x8] sm:$0xf] %v1601
  %1666 = vst [vmem:[%s3 + $0xc] sm:$0xf] %v1602
  %1667 = vst [vmem:[%s3 + $0x10] sm:$0xf] %v1603
  %1668 = vst [vmem:[%s3 + $0x14] sm:$0xf] %v1604
  %1669 = vst [vmem:[%s3 + $0x18] sm:$0xf] %v1605
  %1670 = vst [vmem:[%s3 + $0x1c] sm:$0xf] %v1606
  %1671 = vst [vmem:[%s3 + $0x20] sm:$0xf] %v1607
  %1672 = vst [vmem:[%s3 + $0x24] sm:$0xf] %v1608
  %1673 = vst [vmem:[%s3 + $0x28] sm:$0xf] %v1609
  %1674 = vst [vmem:[%s3 + $0x2c] sm:$0xf] %v1610
  %1675 = vst [vmem:[%s3 + $0x30] sm:$0xf] %v1611
  %1676 = vst [vmem:[%s3 + $0x34] sm:$0xf] %v1612
  %1677 = vst [vmem:[%s3 + $0x38] sm:$0xf] %v1613
  %1678 = vst [vmem:[%s3 + $0x3c] sm:$0xf] %v1614
  %1679 = vst [vmem:[%s3 + $0x40] sm:$0xf] %v1615
  %1680 = vst [vmem:[%s3 + $0x44] sm:$0xf] %v1616
  %1681 = vst [vmem:[%s3 + $0x48] sm:$0xf] %v1617
  %1682 = vst [vmem:[%s3 + $0x4c] sm:$0xf] %v1618
  %1683 = vst [vmem:[%s3 + $0x50] sm:$0xf] %v1619
  %1684 = vst [vmem:[%s3 + $0x54] sm:$0xf] %v1620
  %1685 = vst [vmem:[%s3 + $0x58] sm:$0xf] %v1621
  %1686 = vst [vmem:[%s3 + $0x5c] sm:$0xf] %v1622
  %1687 = vst [vmem:[%s3 + $0x60] sm:$0xf] %v1623
  %1688 = vst [vmem:[%s3 + $0x64] sm:$0xf] %v1624
  %1689 = vst [vmem:[%s3 + $0x68] sm:$0xf] %v1625
  %1690 = vst [vmem:[%s3 + $0x6c] sm:$0xf] %v1626
  %1691 = vst [vmem:[%s3 + $0x70] sm:$0xf] %v1627
  %1692 = vst [vmem:[%s3 + $0x74] sm:$0xf] %v1628
  %1693 = vst [vmem:[%s3 + $0x78] sm:$0xf] %v1629
  %1694 = vst [vmem:[%s3 + $0x7c] sm:$0xf] %v1630
  // Predicated region
  $region14: #{dnn_agent_forward.1} parent=0 // pred_check
    _
  $region15: #{dnn_agent_forward.1} parent=0 // pred_check_branch
    %1696 = sbr.rel (0) target = $region17
  $region16: #{dnn_agent_forward.1} parent=0 // pred_region
    _
  $region17: #{dnn_agent_forward.1} parent=0 // pred_fallthru
    _
  // Predicated region
  $region18: #{dnn_agent_forward.1} parent=0 // pred_check
    _
  $region19: #{dnn_agent_forward.1} parent=0 // pred_check_branch
    %1698 = sbr.rel (0) target = $region21
  $region20: #{dnn_agent_forward.1} parent=0 // pred_region
    _
  $region21: #{dnn_agent_forward.1} parent=0 // pred_fallthru
    _

</llo_original>
